<compile_context>
chip_gen: v6e
topology: v6e:2x2x1
jax: 0.10.0
libtpu: 0.0.40
codegen_flags: <defaults>
</compile_context>

<pallas_src>
import functools
import math

import jax
import jax.numpy as jnp
from jax.experimental import pallas as pl
from jax.experimental.pallas import tpu as pltpu


def _round_up(x, m):
    return (x + m - 1) // m * m


# ----------------------------- Pallas kernel ------------------------------ #
def _lightgcn_fused_kernel(adj_ref, e0_ref, out_ref, x_sc, *, n_layers):
    """Fused LightGCN forward for one lane slab of the embeddings.

    adj_ref : (N, N)   normalized adjacency, bf16, VMEM-resident
                       (single-buffered: constant block index).
    e0_ref  : (N, DT)  layer-0 embeddings slab (f32).
    out_ref : (N, DT)  mean over the (n_layers + 1) layer embeddings (f32);
                       doubles as the running-sum accumulator.
    x_sc    : (N, DT)  f32 VMEM scratch: current layer's embeddings.
    """
    x0 = e0_ref[...].astype(jnp.float32)
    x_sc[...] = x0
    out_ref[...] = x0

    # n_layers is a static Python int -> fully unrolled layer loop.
    for _ in range(n_layers):
        # bf16 x bf16 MXU matmul with f32 accumulation (no f32 adj upcast).
        y = jnp.dot(
            adj_ref[...],
            x_sc[...].astype(jnp.bfloat16),
            preferred_element_type=jnp.float32,
        )
        out_ref[...] += y
        x_sc[...] = y

    out_ref[...] = out_ref[...] * jnp.float32(1.0 / (n_layers + 1))


# ------------------------------ Module glue ------------------------------- #
def prepare_adj(adj):
    """Pad the normalized adjacency to a (128-multiple)^2 bf16 array.

    Call ONCE outside the per-forward path: this hoists the N^2 pad/cast HBM
    rewrite out of every forward call.
    """
    n = adj.shape[0]
    n_p = _round_up(max(n, 128), 128)
    return jnp.pad(adj.astype(jnp.bfloat16), ((0, n_p - n), (0, n_p - n)))


def _usable_vmem_bytes():
    # Generation-aware ceiling: ~52 MiB usable on v7x (64 MiB per TC),
    # ~116 MiB on v5e/v6e (128 MiB).
    try:
        cap = pltpu.get_tpu_info().vmem_capacity_bytes
    except Exception:  # pragma: no cover - conservative fallback (v7x per-TC)
        cap = 64 << 20
    return cap - (12 << 20)


@functools.partial(jax.jit, static_argnames=("n_layers", "d_tile"))
def lightgcn_forward(n_layers, adj_padded, user_embedding, item_embedding,
                     *, d_tile=None):
    """Mirrors LightGCNLayer.forward(n_layers, adj).

    `adj_padded` must come from `prepare_adj` (bf16, zero-padded square array
    whose side is a multiple of 128 and >= n_users + n_items).
    """
    n_users, d = user_embedding.shape
    n_items = item_embedding.shape[0]
    n = n_users + n_items
    n_p = adj_padded.shape[0]
    assert adj_padded.shape == (n_p, n_p)
    assert n_p % 128 == 0 and n_p >= n
    assert adj_padded.dtype == jnp.bfloat16

    # Lane-slab width: 256 fills the 256-wide MXU columns on v6e/v7x; for
    # embedding widths <= 128 a single 128-wide slab suffices.
    # TODO(synk): on v5e (128x128 MXUs) keep d_tile=128 even for wide d.
    if d_tile is None:
        d_tile = 256 if _round_up(d, 128) >= 256 else 128
    assert d_tile % 128 == 0

    e0 = jnp.concatenate([user_embedding, item_embedding], axis=0)
    out_dtype = e0.dtype
    d_p = _round_up(d, d_tile)
    # Zero padding is propagation-invariant (padded adj rows/cols are zero);
    # the e0 pad is O(N*d) and cheap, so it stays in the jitted path.
    e0_p = jnp.pad(e0.astype(jnp.float32), ((0, n_p - n), (0, d_p - d)))

    # Single-buffer the adjacency: constant block index -> DMA'd once, never
    # re-fetched, so a second pipeline buffer is pure VMEM waste.
    try:
        adj_spec = pl.BlockSpec((n_p, n_p), lambda j: (0, 0),
                                pipeline_mode=pl.Buffered(1))
        adj_buffers = 1
    except TypeError:  # older BlockSpec signature without pipeline_mode
        adj_spec = pl.BlockSpec((n_p, n_p), lambda j: (0, 0))
        adj_buffers = 2

    # Explicit VMEM budget: adj block, double-buffered e0/out blocks, x
    # scratch, per-layer bf16 RHS + matmul-result temps, and headroom.
    vmem_budget = (
        adj_buffers * n_p * n_p * 2            # bf16 adjacency block
        + 2 * n_p * d_tile * 4                 # e0 input block (x2 buffers)
        + 2 * n_p * d_tile * 4                 # out block (x2 buffers)
        + n_p * d_tile * 4                     # x scratch
        + n_p * d_tile * (2 + 4)               # bf16 cast temp + dot result
        + (8 << 20)                            # headroom for Mosaic temporaries
    )
    if vmem_budget > _usable_vmem_bytes():
        # TODO(synk): streamed large-N path not implemented.
        raise NotImplementedError(
            "working set too large for the fused VMEM-resident kernel"
        )

    grid = (d_p // d_tile,)

    out = pl.pallas_call(
        functools.partial(_lightgcn_fused_kernel, n_layers=n_layers),
        out_shape=jax.ShapeDtypeStruct((n_p, d_p), jnp.float32),
        grid_spec=pltpu.PrefetchScalarGridSpec(
            num_scalar_prefetch=0,
            grid=grid,
            in_specs=[
                adj_spec,                                     # resident adj
                pl.BlockSpec((n_p, d_tile), lambda j: (0, j)),  # e0 lane slab
            ],
            out_specs=pl.BlockSpec((n_p, d_tile), lambda j: (0, j)),
            scratch_shapes=[
                pltpu.VMEM((n_p, d_tile), jnp.float32),       # current layer x
            ],
        ),
        # TODO(synk): with d_p == d_tile the grid is (1,), so on v7x the second
        #             TensorCore idles; a row-split parallel axis is not done.
        compiler_params=pltpu.CompilerParams(
            dimension_semantics=("parallel",),
            vmem_limit_bytes=int(vmem_budget),
        ),
    )(adj_padded, e0_p)

    mean_embeddings = out[:n, :d].astype(out_dtype)
    return mean_embeddings[:n_users], mean_embeddings[n_users:]


# --------------------------- Input construction ---------------------------- #
def xavier_normal(key, shape, dtype=jnp.float32):
    fan_out, fan_in = shape[0], shape[1]
    std = math.sqrt(2.0 / (fan_in + fan_out))
    return std * jax.random.normal(key, shape, dtype)


def build_normalized_adj(key, n_users, n_items, density=0.05, dtype=jnp.float32):
    """Symmetric-normalized bipartite adjacency D^{-1/2} A D^{-1/2} (dense)."""
    n = n_users + n_items
    r = (jax.random.uniform(key, (n_users, n_items)) < density).astype(dtype)
    a = jnp.zeros((n, n), dtype)
    a = a.at[:n_users, n_users:].set(r)
    a = a.at[n_users:, :n_users].set(r.T)
    deg = jnp.sum(a, axis=1)
    d_inv_sqrt = jnp.where(deg > 0, 1.0 / jnp.sqrt(jnp.maximum(deg, 1e-12)), 0.0)
    return a * d_inv_sqrt[:, None] * d_inv_sqrt[None, :]


# --------------------------------- Main ------------------------------------ #
if __name__ == "__main__":
    n_users, n_items, embedding_size = 96, 160, 64
    n_layers = 3

    key = jax.random.PRNGKey(0)
    k_user, k_item, k_adj = jax.random.split(key, 3)

    user_embedding = xavier_normal(k_user, (n_users, embedding_size))
    item_embedding = xavier_normal(k_item, (n_items, embedding_size))
    adj = build_normalized_adj(k_adj, n_users, n_items)

    # Pad + bf16-cast the adjacency ONCE (hoisted out of the forward path).
    adj_padded = jax.block_until_ready(prepare_adj(adj))

    user_out, item_out = lightgcn_forward(
        n_layers, adj_padded, user_embedding, item_embedding
    )
    jax.block_until_ready((user_out, item_out))

    # Pure-JAX reference with the same math: bf16 adjacency, bf16 per-layer
    # RHS, f32 accumulation.
    n = n_users + n_items
    adj_f32 = adj_padded[:n, :n].astype(jnp.float32)
    e = jnp.concatenate([user_embedding, item_embedding], axis=0).astype(jnp.float32)
    acc = e
    x = e
    for _ in range(n_layers):
        x = adj_f32 @ x.astype(jnp.bfloat16).astype(jnp.float32)
        acc = acc + x
    ref = acc / (n_layers + 1)

    assert user_out.shape == (n_users, embedding_size)
    assert item_out.shape == (n_items, embedding_size)
    assert jnp.allclose(user_out, ref[:n_users], atol=1e-3, rtol=1e-3)
    assert jnp.allclose(item_out, ref[n_users:], atol=1e-3, rtol=1e-3)

    print("KERNEL_OK")
</pallas_src>

<mosaic_0001>
module attributes {stable_mosaic.version = 11 : i64} {
  func.func @_lightgcn_fused_kernel(%arg0: i32, %arg1: memref<256x256xbf16, #tpu.memory_space<vmem>>, %arg2: memref<256x128xf32, #tpu.memory_space<vmem>>, %arg3: memref<256x128xf32, #tpu.memory_space<vmem>>, %arg4: memref<256x128xf32, #tpu.memory_space<vmem>>) attributes {dimension_semantics = [#tpu.dimension_semantics<parallel>], iteration_bounds = array<i64: 1>, scalar_prefetch = 0 : i64, scratch_operands = 1 : i64, tpu.core_type = #tpu.core_type<tc>, window_params = [{pipeline_mode = #tpu.pipeline_mode<synchronous>, transform_indices = @transform_0, window_bounds = array<i64: 256, 256>}, {transform_indices = @transform_1, window_bounds = array<i64: 256, 128>}, {transform_indices = @transform_2, window_bounds = array<i64: 256, 128>}]} {
    %c0 = arith.constant 0 : index
    %c0_0 = arith.constant 0 : index
    %0 = vector.load %arg2[%c0, %c0_0] : memref<256x128xf32, #tpu.memory_space<vmem>>, vector<256x128xf32>
    %c0_1 = arith.constant 0 : index
    %c0_2 = arith.constant 0 : index
    %1 = vector.load %arg4[%c0_1, %c0_2] : memref<256x128xf32, #tpu.memory_space<vmem>>, vector<256x128xf32>
    tpu.vector_store %arg4[%c0_1, %c0_2], %0 {strides = array<i32>} : memref<256x128xf32, #tpu.memory_space<vmem>>, vector<256x128xf32>,
    %c0_3 = arith.constant 0 : index
    %c0_4 = arith.constant 0 : index
    %2 = vector.load %arg3[%c0_3, %c0_4] : memref<256x128xf32, #tpu.memory_space<vmem>>, vector<256x128xf32>
    tpu.vector_store %arg3[%c0_3, %c0_4], %0 {strides = array<i32>} : memref<256x128xf32, #tpu.memory_space<vmem>>, vector<256x128xf32>,
    %c0_5 = arith.constant 0 : index
    %c0_6 = arith.constant 0 : index
    %3 = vector.load %arg1[%c0_5, %c0_6] : memref<256x256xbf16, #tpu.memory_space<vmem>>, vector<256x256xbf16>
    %c0_7 = arith.constant 0 : index
    %c0_8 = arith.constant 0 : index
    %4 = vector.load %arg4[%c0_7, %c0_8] : memref<256x128xf32, #tpu.memory_space<vmem>>, vector<256x128xf32>
    %5 = arith.truncf %4 : vector<256x128xf32> to vector<256x128xbf16>
    %cst = arith.constant dense<0.000000e+00> : vector<256x128xf32>
    %6 = tpu.matmul %3, %5, %cst {dimension_numbers = #tpu.dot_dimension_numbers<[1], [0], [0], [1], [0, 0, 1, 1], [], []>} : vector<256x256xbf16>, vector<256x128xbf16>, vector<256x128xf32> -> vector<256x128xf32>
    %c0_9 = arith.constant 0 : index
    %c0_10 = arith.constant 0 : index
    %7 = vector.load %arg3[%c0_9, %c0_10] : memref<256x128xf32, #tpu.memory_space<vmem>>, vector<256x128xf32>
    %8 = arith.addf %7, %6 : vector<256x128xf32>
    %c0_11 = arith.constant 0 : index
    %c0_12 = arith.constant 0 : index
    %9 = vector.load %arg3[%c0_11, %c0_12] : memref<256x128xf32, #tpu.memory_space<vmem>>, vector<256x128xf32>
    tpu.vector_store %arg3[%c0_11, %c0_12], %8 {strides = array<i32>} : memref<256x128xf32, #tpu.memory_space<vmem>>, vector<256x128xf32>,
    %c0_13 = arith.constant 0 : index
    %c0_14 = arith.constant 0 : index
    %10 = vector.load %arg4[%c0_13, %c0_14] : memref<256x128xf32, #tpu.memory_space<vmem>>, vector<256x128xf32>
    tpu.vector_store %arg4[%c0_13, %c0_14], %6 {strides = array<i32>} : memref<256x128xf32, #tpu.memory_space<vmem>>, vector<256x128xf32>,
    %c0_15 = arith.constant 0 : index
    %c0_16 = arith.constant 0 : index
    %11 = vector.load %arg1[%c0_15, %c0_16] : memref<256x256xbf16, #tpu.memory_space<vmem>>, vector<256x256xbf16>
    %c0_17 = arith.constant 0 : index
    %c0_18 = arith.constant 0 : index
    %12 = vector.load %arg4[%c0_17, %c0_18] : memref<256x128xf32, #tpu.memory_space<vmem>>, vector<256x128xf32>
    %13 = arith.truncf %12 : vector<256x128xf32> to vector<256x128xbf16>
    %cst_19 = arith.constant dense<0.000000e+00> : vector<256x128xf32>
    %14 = tpu.matmul %11, %13, %cst_19 {dimension_numbers = #tpu.dot_dimension_numbers<[1], [0], [0], [1], [0, 0, 1, 1], [], []>} : vector<256x256xbf16>, vector<256x128xbf16>, vector<256x128xf32> -> vector<256x128xf32>
    %c0_20 = arith.constant 0 : index
    %c0_21 = arith.constant 0 : index
    %15 = vector.load %arg3[%c0_20, %c0_21] : memref<256x128xf32, #tpu.memory_space<vmem>>, vector<256x128xf32>
    %16 = arith.addf %15, %14 : vector<256x128xf32>
    %c0_22 = arith.constant 0 : index
    %c0_23 = arith.constant 0 : index
    %17 = vector.load %arg3[%c0_22, %c0_23] : memref<256x128xf32, #tpu.memory_space<vmem>>, vector<256x128xf32>
    tpu.vector_store %arg3[%c0_22, %c0_23], %16 {strides = array<i32>} : memref<256x128xf32, #tpu.memory_space<vmem>>, vector<256x128xf32>,
    %c0_24 = arith.constant 0 : index
    %c0_25 = arith.constant 0 : index
    %18 = vector.load %arg4[%c0_24, %c0_25] : memref<256x128xf32, #tpu.memory_space<vmem>>, vector<256x128xf32>
    tpu.vector_store %arg4[%c0_24, %c0_25], %14 {strides = array<i32>} : memref<256x128xf32, #tpu.memory_space<vmem>>, vector<256x128xf32>,
    %c0_26 = arith.constant 0 : index
    %c0_27 = arith.constant 0 : index
    %19 = vector.load %arg1[%c0_26, %c0_27] : memref<256x256xbf16, #tpu.memory_space<vmem>>, vector<256x256xbf16>
    %c0_28 = arith.constant 0 : index
    %c0_29 = arith.constant 0 : index
    %20 = vector.load %arg4[%c0_28, %c0_29] : memref<256x128xf32, #tpu.memory_space<vmem>>, vector<256x128xf32>
    %21 = arith.truncf %20 : vector<256x128xf32> to vector<256x128xbf16>
    %cst_30 = arith.constant dense<0.000000e+00> : vector<256x128xf32>
    %22 = tpu.matmul %19, %21, %cst_30 {dimension_numbers = #tpu.dot_dimension_numbers<[1], [0], [0], [1], [0, 0, 1, 1], [], []>} : vector<256x256xbf16>, vector<256x128xbf16>, vector<256x128xf32> -> vector<256x128xf32>
    %c0_31 = arith.constant 0 : index
    %c0_32 = arith.constant 0 : index
    %23 = vector.load %arg3[%c0_31, %c0_32] : memref<256x128xf32, #tpu.memory_space<vmem>>, vector<256x128xf32>
    %24 = arith.addf %23, %22 : vector<256x128xf32>
    %c0_33 = arith.constant 0 : index
    %c0_34 = arith.constant 0 : index
    %25 = vector.load %arg3[%c0_33, %c0_34] : memref<256x128xf32, #tpu.memory_space<vmem>>, vector<256x128xf32>
    tpu.vector_store %arg3[%c0_33, %c0_34], %24 {strides = array<i32>} : memref<256x128xf32, #tpu.memory_space<vmem>>, vector<256x128xf32>,
    %c0_35 = arith.constant 0 : index
    %c0_36 = arith.constant 0 : index
    %26 = vector.load %arg4[%c0_35, %c0_36] : memref<256x128xf32, #tpu.memory_space<vmem>>, vector<256x128xf32>
    tpu.vector_store %arg4[%c0_35, %c0_36], %22 {strides = array<i32>} : memref<256x128xf32, #tpu.memory_space<vmem>>, vector<256x128xf32>,
    %c0_37 = arith.constant 0 : index
    %c0_38 = arith.constant 0 : index
    %27 = vector.load %arg3[%c0_37, %c0_38] : memref<256x128xf32, #tpu.memory_space<vmem>>, vector<256x128xf32>
    %cst_39 = arith.constant 2.500000e-01 : f32
    %28 = vector.broadcast %cst_39 : f32 to vector<256x128xf32>
    %29 = arith.mulf %27, %28 : vector<256x128xf32>
    %c0_40 = arith.constant 0 : index
    %c0_41 = arith.constant 0 : index
    %30 = vector.load %arg3[%c0_40, %c0_41] : memref<256x128xf32, #tpu.memory_space<vmem>>, vector<256x128xf32>
    tpu.vector_store %arg3[%c0_40, %c0_41], %29 {strides = array<i32>} : memref<256x128xf32, #tpu.memory_space<vmem>>, vector<256x128xf32>,
    return
  }
  func.func @transform_0(%arg0: i32) -> (i32, i32) {
    %c0_i32 = arith.constant 0 : i32
    %c0_i32_0 = arith.constant 0 : i32
    %c0_i32_1 = arith.constant 0 : i32
    return %c0_i32, %c0_i32_0 : i32, i32
  }
  func.func @transform_1(%arg0: i32) -> (i32, i32) {
    %c0_i32 = arith.constant 0 : i32
    %c0_i32_0 = arith.constant 0 : i32
    return %c0_i32, %arg0 : i32, i32
  }
  func.func @transform_2(%arg0: i32) -> (i32, i32) {
    %c0_i32 = arith.constant 0 : i32
    %c0_i32_0 = arith.constant 0 : i32
    return %c0_i32, %arg0 : i32, i32
  }
}

</mosaic_0001>

<llo_original>
// kernel: lightgcn_forward.1
$region0: #{lightgcn_forward.1}
  #allocation0 [shape = 'u32[]', space=smem, size = 0x4, offset = 0x4, fixed_abs, tag = 'smem constant byte address 0x4 - core index']
  #allocation1 [shape = 'u32[144,128]{1,0:T(1,128)}', space=vmem, size = 0x12000, scoped, tag = 'internal scratch']
  #allocation2 [shape = 'f32[256,128]{1,0:T(8,128)}', space=vmem, size = 0x20000, scoped, tag = 'scratch operand']
  %s0 = inlined_call_operand.vmem [shape: bf16[256,256], index: 0, kind: input, shape index: {}]
  %s1 = inlined_call_operand.vmem [shape: f32[256,128], index: 1, kind: input, shape index: {}]
  %s2 = inlined_call_operand.vmem [shape: f32[256,128], index: 2, kind: output, shape index: {}]
  %s3 = sld [smem:[#allocation0]]
  $region18: #{lightgcn_forward.1} parent=0
    _
  %s5 = ssub.s32 1, %s3
  %s6 = scalar_select 0, %s5, %s3
  // Predicated region
  $region2: #{lightgcn_forward.1} parent=0 // pred_check
    _
  $region3: #{lightgcn_forward.1} parent=0 // pred_check_branch
    %8 = sbr.rel (0) target = $region5
  $region4: #{lightgcn_forward.1} parent=0 // pred_region
    _
  $region5: #{lightgcn_forward.1} parent=0 // pred_fallthru
    _
  // Predicated region
  $region6: #{lightgcn_forward.1} parent=0 // pred_check
    _
  $region7: #{lightgcn_forward.1} parent=0 // pred_check_branch
    %10 = sbr.rel (0) target = $region9
  $region8: #{lightgcn_forward.1} parent=0 // pred_region
    _
  $region9: #{lightgcn_forward.1} parent=0 // pred_fallthru
    _
  %v12 = vld [vmem:[%s1] sm:$0xff]
  %v13 = vld [vmem:[%s1 + $0x8] sm:$0xff]
  %v14 = vld [vmem:[%s1 + $0x10] sm:$0xff]
  %v15 = vld [vmem:[%s1 + $0x18] sm:$0xff]
  %v16 = vld [vmem:[%s1 + $0x20] sm:$0xff]
  %v17 = vld [vmem:[%s1 + $0x28] sm:$0xff]
  %v18 = vld [vmem:[%s1 + $0x30] sm:$0xff]
  %v19 = vld [vmem:[%s1 + $0x38] sm:$0xff]
  %v20 = vld [vmem:[%s1 + $0x40] sm:$0xff]
  %v21 = vld [vmem:[%s1 + $0x48] sm:$0xff]
  %v22 = vld [vmem:[%s1 + $0x50] sm:$0xff]
  %v23 = vld [vmem:[%s1 + $0x58] sm:$0xff]
  %v24 = vld [vmem:[%s1 + $0x60] sm:$0xff]
  %v25 = vld [vmem:[%s1 + $0x68] sm:$0xff]
  %v26 = vld [vmem:[%s1 + $0x70] sm:$0xff]
  %v27 = vld [vmem:[%s1 + $0x78] sm:$0xff]
  %v28 = vld [vmem:[%s1 + $0x80] sm:$0xff]
  %v29 = vld [vmem:[%s1 + $0x88] sm:$0xff]
  %v30 = vld [vmem:[%s1 + $0x90] sm:$0xff]
  %v31 = vld [vmem:[%s1 + $0x98] sm:$0xff]
  %v32 = vld [vmem:[%s1 + $0xa0] sm:$0xff]
  %v33 = vld [vmem:[%s1 + $0xa8] sm:$0xff]
  %v34 = vld [vmem:[%s1 + $0xb0] sm:$0xff]
  %v35 = vld [vmem:[%s1 + $0xb8] sm:$0xff]
  %v36 = vld [vmem:[%s1 + $0xc0] sm:$0xff]
  %v37 = vld [vmem:[%s1 + $0xc8] sm:$0xff]
  %v38 = vld [vmem:[%s1 + $0xd0] sm:$0xff]
  %v39 = vld [vmem:[%s1 + $0xd8] sm:$0xff]
  %v40 = vld [vmem:[%s1 + $0xe0] sm:$0xff]
  %v41 = vld [vmem:[%s1 + $0xe8] sm:$0xff]
  %v42 = vld [vmem:[%s1 + $0xf0] sm:$0xff]
  %v43 = vld [vmem:[%s1 + $0xf8] sm:$0xff]
  %44 = vst [vmem:[#allocation2] sm:$0xff] %v12
  %45 = vst [vmem:[#allocation2 + $0x8] sm:$0xff] %v13
  %46 = vst [vmem:[#allocation2 + $0x10] sm:$0xff] %v14
  %47 = vst [vmem:[#allocation2 + $0x18] sm:$0xff] %v15
  %48 = vst [vmem:[#allocation2 + $0x20] sm:$0xff] %v16
  %49 = vst [vmem:[#allocation2 + $0x28] sm:$0xff] %v17
  %50 = vst [vmem:[#allocation2 + $0x30] sm:$0xff] %v18
  %51 = vst [vmem:[#allocation2 + $0x38] sm:$0xff] %v19
  %52 = vst [vmem:[#allocation2 + $0x40] sm:$0xff] %v20
  %53 = vst [vmem:[#allocation2 + $0x48] sm:$0xff] %v21
  %54 = vst [vmem:[#allocation2 + $0x50] sm:$0xff] %v22
  %55 = vst [vmem:[#allocation2 + $0x58] sm:$0xff] %v23
  %56 = vst [vmem:[#allocation2 + $0x60] sm:$0xff] %v24
  %57 = vst [vmem:[#allocation2 + $0x68] sm:$0xff] %v25
  %58 = vst [vmem:[#allocation2 + $0x70] sm:$0xff] %v26
  %59 = vst [vmem:[#allocation2 + $0x78] sm:$0xff] %v27
  %60 = vst [vmem:[#allocation2 + $0x80] sm:$0xff] %v28
  %61 = vst [vmem:[#allocation2 + $0x88] sm:$0xff] %v29
  %62 = vst [vmem:[#allocation2 + $0x90] sm:$0xff] %v30
  %63 = vst [vmem:[#allocation2 + $0x98] sm:$0xff] %v31
  %64 = vst [vmem:[#allocation2 + $0xa0] sm:$0xff] %v32
  %65 = vst [vmem:[#allocation2 + $0xa8] sm:$0xff] %v33
  %66 = vst [vmem:[#allocation2 + $0xb0] sm:$0xff] %v34
  %67 = vst [vmem:[#allocation2 + $0xb8] sm:$0xff] %v35
  %68 = vst [vmem:[#allocation2 + $0xc0] sm:$0xff] %v36
  %69 = vst [vmem:[#allocation2 + $0xc8] sm:$0xff] %v37
  %70 = vst [vmem:[#allocation2 + $0xd0] sm:$0xff] %v38
  %71 = vst [vmem:[#allocation2 + $0xd8] sm:$0xff] %v39
  %72 = vst [vmem:[#allocation2 + $0xe0] sm:$0xff] %v40
  %73 = vst [vmem:[#allocation2 + $0xe8] sm:$0xff] %v41
  %74 = vst [vmem:[#allocation2 + $0xf0] sm:$0xff] %v42
  %75 = vst [vmem:[#allocation2 + $0xf8] sm:$0xff] %v43
  %76 = vst [vmem:[%s2] sm:$0xff] %v12
  %77 = vst [vmem:[%s2 + $0x8] sm:$0xff] %v13
  %78 = vst [vmem:[%s2 + $0x10] sm:$0xff] %v14
  %79 = vst [vmem:[%s2 + $0x18] sm:$0xff] %v15
  %80 = vst [vmem:[%s2 + $0x20] sm:$0xff] %v16
  %81 = vst [vmem:[%s2 + $0x28] sm:$0xff] %v17
  %82 = vst [vmem:[%s2 + $0x30] sm:$0xff] %v18
  %83 = vst [vmem:[%s2 + $0x38] sm:$0xff] %v19
  %84 = vst [vmem:[%s2 + $0x40] sm:$0xff] %v20
  %85 = vst [vmem:[%s2 + $0x48] sm:$0xff] %v21
  %86 = vst [vmem:[%s2 + $0x50] sm:$0xff] %v22
  %87 = vst [vmem:[%s2 + $0x58] sm:$0xff] %v23
  %88 = vst [vmem:[%s2 + $0x60] sm:$0xff] %v24
  %89 = vst [vmem:[%s2 + $0x68] sm:$0xff] %v25
  %90 = vst [vmem:[%s2 + $0x70] sm:$0xff] %v26
  %91 = vst [vmem:[%s2 + $0x78] sm:$0xff] %v27
  %92 = vst [vmem:[%s2 + $0x80] sm:$0xff] %v28
  %93 = vst [vmem:[%s2 + $0x88] sm:$0xff] %v29
  %94 = vst [vmem:[%s2 + $0x90] sm:$0xff] %v30
  %95 = vst [vmem:[%s2 + $0x98] sm:$0xff] %v31
  %96 = vst [vmem:[%s2 + $0xa0] sm:$0xff] %v32
  %97 = vst [vmem:[%s2 + $0xa8] sm:$0xff] %v33
  %98 = vst [vmem:[%s2 + $0xb0] sm:$0xff] %v34
  %99 = vst [vmem:[%s2 + $0xb8] sm:$0xff] %v35
  %100 = vst [vmem:[%s2 + $0xc0] sm:$0xff] %v36
  %101 = vst [vmem:[%s2 + $0xc8] sm:$0xff] %v37
  %102 = vst [vmem:[%s2 + $0xd0] sm:$0xff] %v38
  %103 = vst [vmem:[%s2 + $0xd8] sm:$0xff] %v39
  %104 = vst [vmem:[%s2 + $0xe0] sm:$0xff] %v40
  %105 = vst [vmem:[%s2 + $0xe8] sm:$0xff] %v41
  %106 = vst [vmem:[%s2 + $0xf0] sm:$0xff] %v42
  %107 = vst [vmem:[%s2 + $0xf8] sm:$0xff] %v43
  %v108 = vld [vmem:[%s0] sm:$0xff]
  %v109 = vld [vmem:[%s0 + $0x8] sm:$0xff]
  %v110 = vld [vmem:[%s0 + $0x10] sm:$0xff]
  %v111 = vld [vmem:[%s0 + $0x18] sm:$0xff]
  %v112 = vld [vmem:[%s0 + $0x20] sm:$0xff]
  %v113 = vld [vmem:[%s0 + $0x28] sm:$0xff]
  %v114 = vld [vmem:[%s0 + $0x30] sm:$0xff]
  %v115 = vld [vmem:[%s0 + $0x38] sm:$0xff]
  %v116 = vld [vmem:[%s0 + $0x40] sm:$0xff]
  %v117 = vld [vmem:[%s0 + $0x48] sm:$0xff]
  %v118 = vld [vmem:[%s0 + $0x50] sm:$0xff]
  %v119 = vld [vmem:[%s0 + $0x58] sm:$0xff]
  %v120 = vld [vmem:[%s0 + $0x60] sm:$0xff]
  %v121 = vld [vmem:[%s0 + $0x68] sm:$0xff]
  %v122 = vld [vmem:[%s0 + $0x70] sm:$0xff]
  %v123 = vld [vmem:[%s0 + $0x78] sm:$0xff]
  %v124 = vld [vmem:[%s0 + $0x80] sm:$0xff]
  %v125 = vld [vmem:[%s0 + $0x88] sm:$0xff]
  %v126 = vld [vmem:[%s0 + $0x90] sm:$0xff]
  %v127 = vld [vmem:[%s0 + $0x98] sm:$0xff]
  %v128 = vld [vmem:[%s0 + $0xa0] sm:$0xff]
  %v129 = vld [vmem:[%s0 + $0xa8] sm:$0xff]
  %v130 = vld [vmem:[%s0 + $0xb0] sm:$0xff]
  %v131 = vld [vmem:[%s0 + $0xb8] sm:$0xff]
  %v132 = vld [vmem:[%s0 + $0xc0] sm:$0xff]
  %v133 = vld [vmem:[%s0 + $0xc8] sm:$0xff]
  %v134 = vld [vmem:[%s0 + $0xd0] sm:$0xff]
  %v135 = vld [vmem:[%s0 + $0xd8] sm:$0xff]
  %v136 = vld [vmem:[%s0 + $0xe0] sm:$0xff]
  %v137 = vld [vmem:[%s0 + $0xe8] sm:$0xff]
  %v138 = vld [vmem:[%s0 + $0xf0] sm:$0xff]
  %v139 = vld [vmem:[%s0 + $0xf8] sm:$0xff]
  %v140 = vld [vmem:[#allocation2] sm:$0xff]
  %v141 = vld [vmem:[#allocation2 + $0x8] sm:$0xff]
  %v142 = vld [vmem:[#allocation2 + $0x10] sm:$0xff]
  %v143 = vld [vmem:[#allocation2 + $0x18] sm:$0xff]
  %v144 = vld [vmem:[#allocation2 + $0x20] sm:$0xff]
  %v145 = vld [vmem:[#allocation2 + $0x28] sm:$0xff]
  %v146 = vld [vmem:[#allocation2 + $0x30] sm:$0xff]
  %v147 = vld [vmem:[#allocation2 + $0x38] sm:$0xff]
  %v148 = vld [vmem:[#allocation2 + $0x40] sm:$0xff]
  %v149 = vld [vmem:[#allocation2 + $0x48] sm:$0xff]
  %v150 = vld [vmem:[#allocation2 + $0x50] sm:$0xff]
  %v151 = vld [vmem:[#allocation2 + $0x58] sm:$0xff]
  %v152 = vld [vmem:[#allocation2 + $0x60] sm:$0xff]
  %v153 = vld [vmem:[#allocation2 + $0x68] sm:$0xff]
  %v154 = vld [vmem:[#allocation2 + $0x70] sm:$0xff]
  %v155 = vld [vmem:[#allocation2 + $0x78] sm:$0xff]
  %v156 = vld [vmem:[#allocation2 + $0x80] sm:$0xff]
  %v157 = vld [vmem:[#allocation2 + $0x88] sm:$0xff]
  %v158 = vld [vmem:[#allocation2 + $0x90] sm:$0xff]
  %v159 = vld [vmem:[#allocation2 + $0x98] sm:$0xff]
  %v160 = vld [vmem:[#allocation2 + $0xa0] sm:$0xff]
  %v161 = vld [vmem:[#allocation2 + $0xa8] sm:$0xff]
  %v162 = vld [vmem:[#allocation2 + $0xb0] sm:$0xff]
  %v163 = vld [vmem:[#allocation2 + $0xb8] sm:$0xff]
  %v164 = vld [vmem:[#allocation2 + $0xc0] sm:$0xff]
  %v165 = vld [vmem:[#allocation2 + $0xc8] sm:$0xff]
  %v166 = vld [vmem:[#allocation2 + $0xd0] sm:$0xff]
  %v167 = vld [vmem:[#allocation2 + $0xd8] sm:$0xff]
  %v168 = vld [vmem:[#allocation2 + $0xe0] sm:$0xff]
  %v169 = vld [vmem:[#allocation2 + $0xe8] sm:$0xff]
  %v170 = vld [vmem:[#allocation2 + $0xf0] sm:$0xff]
  %v171 = vld [vmem:[#allocation2 + $0xf8] sm:$0xff]
  %v172 = vpack.c.bf16 %v141, %v140
  %v173 = vpack.c.bf16 %v143, %v142
  %v174 = vpack.c.bf16 %v145, %v144
  %v175 = vpack.c.bf16 %v147, %v146
  %v176 = vpack.c.bf16 %v149, %v148
  %v177 = vpack.c.bf16 %v151, %v150
  %v178 = vpack.c.bf16 %v153, %v152
  %v179 = vpack.c.bf16 %v155, %v154
  %v180 = vpack.c.bf16 %v157, %v156
  %v181 = vpack.c.bf16 %v159, %v158
  %v182 = vpack.c.bf16 %v161, %v160
  %v183 = vpack.c.bf16 %v163, %v162
  %v184 = vpack.c.bf16 %v165, %v164
  %v185 = vpack.c.bf16 %v167, %v166
  %v186 = vpack.c.bf16 %v169, %v168
  %v187 = vpack.c.bf16 %v171, %v170
  %v220 = vunpack.c.l.b16 %v108
  %v221 = vunpack.c.h.b16 %v108
  %v222 = vunpack.c.l.b16 %v109
  %v223 = vunpack.c.h.b16 %v109
  %v224 = vunpack.c.l.b16 %v110
  %v225 = vunpack.c.h.b16 %v110
  %v226 = vunpack.c.l.b16 %v111
  %v227 = vunpack.c.h.b16 %v111
  %v228 = vunpack.c.l.b16 %v112
  %v229 = vunpack.c.h.b16 %v112
  %v230 = vunpack.c.l.b16 %v113
  %v231 = vunpack.c.h.b16 %v113
  %v232 = vunpack.c.l.b16 %v114
  %v233 = vunpack.c.h.b16 %v114
  %v234 = vunpack.c.l.b16 %v115
  %v235 = vunpack.c.h.b16 %v115
  %v236 = vunpack.c.l.b16 %v116
  %v237 = vunpack.c.h.b16 %v116
  %v238 = vunpack.c.l.b16 %v117
  %v239 = vunpack.c.h.b16 %v117
  %v240 = vunpack.c.l.b16 %v118
  %v241 = vunpack.c.h.b16 %v118
  %v242 = vunpack.c.l.b16 %v119
  %v243 = vunpack.c.h.b16 %v119
  %v244 = vunpack.c.l.b16 %v120
  %v245 = vunpack.c.h.b16 %v120
  %v246 = vunpack.c.l.b16 %v121
  %v247 = vunpack.c.h.b16 %v121
  %v248 = vunpack.c.l.b16 %v122
  %v249 = vunpack.c.h.b16 %v122
  %v250 = vunpack.c.l.b16 %v123
  %v251 = vunpack.c.h.b16 %v123
  %v252 = vunpack.c.l.b16 %v124
  %v253 = vunpack.c.h.b16 %v124
  %v254 = vunpack.c.l.b16 %v125
  %v255 = vunpack.c.h.b16 %v125
  %v256 = vunpack.c.l.b16 %v126
  %v257 = vunpack.c.h.b16 %v126
  %v258 = vunpack.c.l.b16 %v127
  %v259 = vunpack.c.h.b16 %v127
  %v260 = vunpack.c.l.b16 %v128
  %v261 = vunpack.c.h.b16 %v128
  %v262 = vunpack.c.l.b16 %v129
  %v263 = vunpack.c.h.b16 %v129
  %v264 = vunpack.c.l.b16 %v130
  %v265 = vunpack.c.h.b16 %v130
  %v266 = vunpack.c.l.b16 %v131
  %v267 = vunpack.c.h.b16 %v131
  %v268 = vunpack.c.l.b16 %v132
  %v269 = vunpack.c.h.b16 %v132
  %v270 = vunpack.c.l.b16 %v133
  %v271 = vunpack.c.h.b16 %v133
  %v272 = vunpack.c.l.b16 %v134
  %v273 = vunpack.c.h.b16 %v134
  %v274 = vunpack.c.l.b16 %v135
  %v275 = vunpack.c.h.b16 %v135
  %v276 = vunpack.c.l.b16 %v136
  %v277 = vunpack.c.h.b16 %v136
  %v278 = vunpack.c.l.b16 %v137
  %v279 = vunpack.c.h.b16 %v137
  %v280 = vunpack.c.l.b16 %v138
  %v281 = vunpack.c.h.b16 %v138
  %v282 = vunpack.c.l.b16 %v139
  %v283 = vunpack.c.h.b16 %v139
  %v284 = vpack.c.b16 %v222, %v220
  %v285 = vpack.c.b16 %v223, %v221
  %v286 = vpack.c.b16 %v226, %v224
  %v287 = vpack.c.b16 %v227, %v225
  %v288 = vpack.c.b16 %v230, %v228
  %v289 = vpack.c.b16 %v231, %v229
  %v290 = vpack.c.b16 %v234, %v232
  %v291 = vpack.c.b16 %v235, %v233
  %v292 = vpack.c.b16 %v238, %v236
  %v293 = vpack.c.b16 %v239, %v237
  %v294 = vpack.c.b16 %v242, %v240
  %v295 = vpack.c.b16 %v243, %v241
  %v296 = vpack.c.b16 %v246, %v244
  %v297 = vpack.c.b16 %v247, %v245
  %v298 = vpack.c.b16 %v250, %v248
  %v299 = vpack.c.b16 %v251, %v249
  %v300 = vpack.c.b16 %v254, %v252
  %v301 = vpack.c.b16 %v255, %v253
  %v302 = vpack.c.b16 %v258, %v256
  %v303 = vpack.c.b16 %v259, %v257
  %v304 = vpack.c.b16 %v262, %v260
  %v305 = vpack.c.b16 %v263, %v261
  %v306 = vpack.c.b16 %v266, %v264
  %v307 = vpack.c.b16 %v267, %v265
  %v308 = vpack.c.b16 %v270, %v268
  %v309 = vpack.c.b16 %v271, %v269
  %v310 = vpack.c.b16 %v274, %v272
  %v311 = vpack.c.b16 %v275, %v273
  %v312 = vpack.c.b16 %v278, %v276
  %v313 = vpack.c.b16 %v279, %v277
  %v314 = vpack.c.b16 %v282, %v280
  %v315 = vpack.c.b16 %v283, %v281
  %348 = vmatprep.subr.bf16.mxu0 0
  %349 = vmatpush1.bf16.msra.mxu0 %v179
  %350 = vmatprep.subr.bf16.mxu0 0
  %351 = vmatpush1.bf16.msra.mxu0 %v178
  %352 = vmatprep.subr.bf16.mxu0 0
  %353 = vmatpush1.bf16.msra.mxu0 %v177
  %354 = vmatprep.subr.bf16.mxu0 0
  %355 = vmatpush1.bf16.msra.mxu0 %v176
  %356 = vmatprep.subr.bf16.mxu0 0
  %357 = vmatpush1.bf16.msra.mxu0 %v175
  %358 = vmatprep.subr.bf16.mxu0 0
  %359 = vmatpush1.bf16.msra.mxu0 %v174
  %360 = vmatprep.subr.bf16.mxu0 0
  %361 = vmatpush1.bf16.msra.mxu0 %v173
  %362 = vmatprep.subr.bf16.mxu0 0
  %363 = vmatpush1.bf16.msra.mxu0 %v172
  %364 = vmatprep.subr.bf16.mxu0 0
  %365 = vmatpush2.bf16.msra.mxu0 %v187
  %366 = vmatprep.subr.bf16.mxu0 0
  %367 = vmatpush2.bf16.msra.mxu0 %v186
  %368 = vmatprep.subr.bf16.mxu0 0
  %369 = vmatpush2.bf16.msra.mxu0 %v185
  %370 = vmatprep.subr.bf16.mxu0 0
  %371 = vmatpush2.bf16.msra.mxu0 %v184
  %372 = vmatprep.subr.bf16.mxu0 0
  %373 = vmatpush2.bf16.msra.mxu0 %v183
  %374 = vmatprep.subr.bf16.mxu0 0
  %375 = vmatpush2.bf16.msra.mxu0 %v182
  %376 = vmatprep.subr.bf16.mxu0 0
  %377 = vmatpush2.bf16.msra.mxu0 %v181
  %378 = vmatprep.subr.bf16.mxu0 0
  %379 = vmatpush2.bf16.msra.mxu0 %v180
  %380 = vmatprep.mubr.bf16.mxu0 %v285
  %381 = vmatmul.mubr.bf16.gmra.mxu0 %v284
  %v382 = vpop.f32.mrf.mxu0
  %v383 = vadd.f32 0.0, %v382
  %v384 = vpop.f32.mrf.mxu0
  %v385 = vpop.f32.mrf.mxu0
  %v386 = vadd.f32 0.0, %v385
  %v387 = vpop.f32.mrf.mxu0
  %388 = vmatprep.mubr.bf16.mxu0 %v287
  %389 = vmatmul.mubr.bf16.gmra.mxu0 %v286
  %v390 = vpop.f32.mrf.mxu0
  %v391 = vadd.f32 0.0, %v390
  %v392 = vpop.f32.mrf.mxu0
  %v393 = vpop.f32.mrf.mxu0
  %v394 = vadd.f32 0.0, %v393
  %v395 = vpop.f32.mrf.mxu0
  %396 = vmatprep.mubr.bf16.mxu0 %v289
  %397 = vmatmul.mubr.bf16.gmra.mxu0 %v288
  %v398 = vpop.f32.mrf.mxu0
  %v399 = vadd.f32 0.0, %v398
  %v400 = vpop.f32.mrf.mxu0
  %v401 = vpop.f32.mrf.mxu0
  %v402 = vadd.f32 0.0, %v401
  %v403 = vpop.f32.mrf.mxu0
  %404 = vmatprep.mubr.bf16.mxu0 %v291
  %405 = vmatmul.mubr.bf16.gmra.mxu0 %v290
  %v406 = vpop.f32.mrf.mxu0
  %v407 = vadd.f32 0.0, %v406
  %v408 = vpop.f32.mrf.mxu0
  %v409 = vpop.f32.mrf.mxu0
  %v410 = vadd.f32 0.0, %v409
  %v411 = vpop.f32.mrf.mxu0
  %412 = vmatprep.mubr.bf16.mxu0 %v293
  %413 = vmatmul.mubr.bf16.gmra.mxu0 %v292
  %v414 = vpop.f32.mrf.mxu0
  %v415 = vadd.f32 0.0, %v414
  %v416 = vpop.f32.mrf.mxu0
  %v417 = vpop.f32.mrf.mxu0
  %v418 = vadd.f32 0.0, %v417
  %v419 = vpop.f32.mrf.mxu0
  %420 = vmatprep.mubr.bf16.mxu0 %v295
  %421 = vmatmul.mubr.bf16.gmra.mxu0 %v294
  %v422 = vpop.f32.mrf.mxu0
  %v423 = vadd.f32 0.0, %v422
  %v424 = vpop.f32.mrf.mxu0
  %v425 = vpop.f32.mrf.mxu0
  %v426 = vadd.f32 0.0, %v425
  %v427 = vpop.f32.mrf.mxu0
  %428 = vmatprep.mubr.bf16.mxu0 %v297
  %429 = vmatmul.mubr.bf16.gmra.mxu0 %v296
  %v430 = vpop.f32.mrf.mxu0
  %v431 = vadd.f32 0.0, %v430
  %v432 = vpop.f32.mrf.mxu0
  %v433 = vpop.f32.mrf.mxu0
  %v434 = vadd.f32 0.0, %v433
  %v435 = vpop.f32.mrf.mxu0
  %436 = vmatprep.mubr.bf16.mxu0 %v299
  %437 = vmatmul.mubr.bf16.gmra.mxu0 %v298
  %v438 = vpop.f32.mrf.mxu0
  %v439 = vadd.f32 0.0, %v438
  %v440 = vpop.f32.mrf.mxu0
  %v441 = vpop.f32.mrf.mxu0
  %v442 = vadd.f32 0.0, %v441
  %v443 = vpop.f32.mrf.mxu0
  %444 = vmatprep.mubr.bf16.mxu0 %v301
  %445 = vmatmul.mubr.bf16.gmra.mxu0 %v300
  %v446 = vpop.f32.mrf.mxu0
  %v447 = vadd.f32 0.0, %v446
  %v448 = vpop.f32.mrf.mxu0
  %v449 = vpop.f32.mrf.mxu0
  %v450 = vadd.f32 0.0, %v449
  %v451 = vpop.f32.mrf.mxu0
  %452 = vmatprep.mubr.bf16.mxu0 %v303
  %453 = vmatmul.mubr.bf16.gmra.mxu0 %v302
  %v454 = vpop.f32.mrf.mxu0
  %v455 = vadd.f32 0.0, %v454
  %v456 = vpop.f32.mrf.mxu0
  %v457 = vpop.f32.mrf.mxu0
  %v458 = vadd.f32 0.0, %v457
  %v459 = vpop.f32.mrf.mxu0
  %460 = vmatprep.mubr.bf16.mxu0 %v305
  %461 = vmatmul.mubr.bf16.gmra.mxu0 %v304
  %v462 = vpop.f32.mrf.mxu0
  %v463 = vadd.f32 0.0, %v462
  %v464 = vpop.f32.mrf.mxu0
  %v465 = vpop.f32.mrf.mxu0
  %v466 = vadd.f32 0.0, %v465
  %v467 = vpop.f32.mrf.mxu0
  %468 = vmatprep.mubr.bf16.mxu0 %v307
  %469 = vmatmul.mubr.bf16.gmra.mxu0 %v306
  %v470 = vpop.f32.mrf.mxu0
  %v471 = vadd.f32 0.0, %v470
  %v472 = vpop.f32.mrf.mxu0
  %v473 = vpop.f32.mrf.mxu0
  %v474 = vadd.f32 0.0, %v473
  %v475 = vpop.f32.mrf.mxu0
  %476 = vmatprep.mubr.bf16.mxu0 %v309
  %477 = vmatmul.mubr.bf16.gmra.mxu0 %v308
  %v478 = vpop.f32.mrf.mxu0
  %v479 = vadd.f32 0.0, %v478
  %v480 = vpop.f32.mrf.mxu0
  %v481 = vpop.f32.mrf.mxu0
  %v482 = vadd.f32 0.0, %v481
  %v483 = vpop.f32.mrf.mxu0
  %484 = vmatprep.mubr.bf16.mxu0 %v311
  %485 = vmatmul.mubr.bf16.gmra.mxu0 %v310
  %v486 = vpop.f32.mrf.mxu0
  %v487 = vadd.f32 0.0, %v486
  %v488 = vpop.f32.mrf.mxu0
  %v489 = vpop.f32.mrf.mxu0
  %v490 = vadd.f32 0.0, %v489
  %v491 = vpop.f32.mrf.mxu0
  %492 = vmatprep.mubr.bf16.mxu0 %v313
  %493 = vmatmul.mubr.bf16.gmra.mxu0 %v312
  %v494 = vpop.f32.mrf.mxu0
  %v495 = vadd.f32 0.0, %v494
  %v496 = vpop.f32.mrf.mxu0
  %v497 = vpop.f32.mrf.mxu0
  %v498 = vadd.f32 0.0, %v497
  %v499 = vpop.f32.mrf.mxu0
  %500 = vmatprep.mubr.bf16.mxu0 %v315
  %501 = vmatmul.mubr.bf16.gmra.mxu0 %v314
  %v502 = vpop.f32.mrf.mxu0
  %v503 = vadd.f32 0.0, %v502
  %v504 = vpop.f32.mrf.mxu0
  %v505 = vpop.f32.mrf.mxu0
  %v506 = vadd.f32 0.0, %v505
  %v507 = vpop.f32.mrf.mxu0
  %508 = vdwg.mxu0
  %v509 = vld [vmem:[%s2] sm:$0xff]
  %v510 = vld [vmem:[%s2 + $0x8] sm:$0xff]
  %v511 = vld [vmem:[%s2 + $0x10] sm:$0xff]
  %v512 = vld [vmem:[%s2 + $0x18] sm:$0xff]
  %v513 = vld [vmem:[%s2 + $0x20] sm:$0xff]
  %v514 = vld [vmem:[%s2 + $0x28] sm:$0xff]
  %v515 = vld [vmem:[%s2 + $0x30] sm:$0xff]
  %v516 = vld [vmem:[%s2 + $0x38] sm:$0xff]
  %v517 = vld [vmem:[%s2 + $0x40] sm:$0xff]
  %v518 = vld [vmem:[%s2 + $0x48] sm:$0xff]
  %v519 = vld [vmem:[%s2 + $0x50] sm:$0xff]
  %v520 = vld [vmem:[%s2 + $0x58] sm:$0xff]
  %v521 = vld [vmem:[%s2 + $0x60] sm:$0xff]
  %v522 = vld [vmem:[%s2 + $0x68] sm:$0xff]
  %v523 = vld [vmem:[%s2 + $0x70] sm:$0xff]
  %v524 = vld [vmem:[%s2 + $0x78] sm:$0xff]
  %v525 = vld [vmem:[%s2 + $0x80] sm:$0xff]
  %v526 = vld [vmem:[%s2 + $0x88] sm:$0xff]
  %v527 = vld [vmem:[%s2 + $0x90] sm:$0xff]
  %v528 = vld [vmem:[%s2 + $0x98] sm:$0xff]
  %v529 = vld [vmem:[%s2 + $0xa0] sm:$0xff]
  %v530 = vld [vmem:[%s2 + $0xa8] sm:$0xff]
  %v531 = vld [vmem:[%s2 + $0xb0] sm:$0xff]
  %v532 = vld [vmem:[%s2 + $0xb8] sm:$0xff]
  %v533 = vld [vmem:[%s2 + $0xc0] sm:$0xff]
  %v534 = vld [vmem:[%s2 + $0xc8] sm:$0xff]
  %v535 = vld [vmem:[%s2 + $0xd0] sm:$0xff]
  %v536 = vld [vmem:[%s2 + $0xd8] sm:$0xff]
  %v537 = vld [vmem:[%s2 + $0xe0] sm:$0xff]
  %v538 = vld [vmem:[%s2 + $0xe8] sm:$0xff]
  %v539 = vld [vmem:[%s2 + $0xf0] sm:$0xff]
  %v540 = vld [vmem:[%s2 + $0xf8] sm:$0xff]
  %v541 = vadd.f32 %v509, %v383
  %v542 = vadd.f32 %v510, %v386
  %v543 = vadd.f32 %v511, %v391
  %v544 = vadd.f32 %v512, %v394
  %v545 = vadd.f32 %v513, %v399
  %v546 = vadd.f32 %v514, %v402
  %v547 = vadd.f32 %v515, %v407
  %v548 = vadd.f32 %v516, %v410
  %v549 = vadd.f32 %v517, %v415
  %v550 = vadd.f32 %v518, %v418
  %v551 = vadd.f32 %v519, %v423
  %v552 = vadd.f32 %v520, %v426
  %v553 = vadd.f32 %v521, %v431
  %v554 = vadd.f32 %v522, %v434
  %v555 = vadd.f32 %v523, %v439
  %v556 = vadd.f32 %v524, %v442
  %v557 = vadd.f32 %v525, %v447
  %v558 = vadd.f32 %v526, %v450
  %v559 = vadd.f32 %v527, %v455
  %v560 = vadd.f32 %v528, %v458
  %v561 = vadd.f32 %v529, %v463
  %v562 = vadd.f32 %v530, %v466
  %v563 = vadd.f32 %v531, %v471
  %v564 = vadd.f32 %v532, %v474
  %v565 = vadd.f32 %v533, %v479
  %v566 = vadd.f32 %v534, %v482
  %v567 = vadd.f32 %v535, %v487
  %v568 = vadd.f32 %v536, %v490
  %v569 = vadd.f32 %v537, %v495
  %v570 = vadd.f32 %v538, %v498
  %v571 = vadd.f32 %v539, %v503
  %v572 = vadd.f32 %v540, %v506
  %573 = vst [vmem:[%s2] sm:$0xff] %v541
  %574 = vst [vmem:[%s2 + $0x8] sm:$0xff] %v542
  %575 = vst [vmem:[%s2 + $0x10] sm:$0xff] %v543
  %576 = vst [vmem:[%s2 + $0x18] sm:$0xff] %v544
  %577 = vst [vmem:[%s2 + $0x20] sm:$0xff] %v545
  %578 = vst [vmem:[%s2 + $0x28] sm:$0xff] %v546
  %579 = vst [vmem:[%s2 + $0x30] sm:$0xff] %v547
  %580 = vst [vmem:[%s2 + $0x38] sm:$0xff] %v548
  %581 = vst [vmem:[%s2 + $0x40] sm:$0xff] %v549
  %582 = vst [vmem:[%s2 + $0x48] sm:$0xff] %v550
  %583 = vst [vmem:[%s2 + $0x50] sm:$0xff] %v551
  %584 = vst [vmem:[%s2 + $0x58] sm:$0xff] %v552
  %585 = vst [vmem:[%s2 + $0x60] sm:$0xff] %v553
  %586 = vst [vmem:[%s2 + $0x68] sm:$0xff] %v554
  %587 = vst [vmem:[%s2 + $0x70] sm:$0xff] %v555
  %588 = vst [vmem:[%s2 + $0x78] sm:$0xff] %v556
  %589 = vst [vmem:[%s2 + $0x80] sm:$0xff] %v557
  %590 = vst [vmem:[%s2 + $0x88] sm:$0xff] %v558
  %591 = vst [vmem:[%s2 + $0x90] sm:$0xff] %v559
  %592 = vst [vmem:[%s2 + $0x98] sm:$0xff] %v560
  %593 = vst [vmem:[%s2 + $0xa0] sm:$0xff] %v561
  %594 = vst [vmem:[%s2 + $0xa8] sm:$0xff] %v562
  %595 = vst [vmem:[%s2 + $0xb0] sm:$0xff] %v563
  %596 = vst [vmem:[%s2 + $0xb8] sm:$0xff] %v564
  %597 = vst [vmem:[%s2 + $0xc0] sm:$0xff] %v565
  %598 = vst [vmem:[%s2 + $0xc8] sm:$0xff] %v566
  %599 = vst [vmem:[%s2 + $0xd0] sm:$0xff] %v567
  %600 = vst [vmem:[%s2 + $0xd8] sm:$0xff] %v568
  %601 = vst [vmem:[%s2 + $0xe0] sm:$0xff] %v569
  %602 = vst [vmem:[%s2 + $0xe8] sm:$0xff] %v570
  %603 = vst [vmem:[%s2 + $0xf0] sm:$0xff] %v571
  %604 = vst [vmem:[%s2 + $0xf8] sm:$0xff] %v572
  %605 = vst [vmem:[#allocation2] sm:$0xff] %v383
  %606 = vst [vmem:[#allocation2 + $0x8] sm:$0xff] %v386
  %607 = vst [vmem:[#allocation2 + $0x10] sm:$0xff] %v391
  %608 = vst [vmem:[#allocation2 + $0x18] sm:$0xff] %v394
  %609 = vst [vmem:[#allocation2 + $0x20] sm:$0xff] %v399
  %610 = vst [vmem:[#allocation2 + $0x28] sm:$0xff] %v402
  %611 = vst [vmem:[#allocation2 + $0x30] sm:$0xff] %v407
  %612 = vst [vmem:[#allocation2 + $0x38] sm:$0xff] %v410
  %613 = vst [vmem:[#allocation2 + $0x40] sm:$0xff] %v415
  %614 = vst [vmem:[#allocation2 + $0x48] sm:$0xff] %v418
  %615 = vst [vmem:[#allocation2 + $0x50] sm:$0xff] %v423
  %616 = vst [vmem:[#allocation2 + $0x58] sm:$0xff] %v426
  %617 = vst [vmem:[#allocation2 + $0x60] sm:$0xff] %v431
  %618 = vst [vmem:[#allocation2 + $0x68] sm:$0xff] %v434
  %619 = vst [vmem:[#allocation2 + $0x70] sm:$0xff] %v439
  %620 = vst [vmem:[#allocation2 + $0x78] sm:$0xff] %v442
  %621 = vst [vmem:[#allocation2 + $0x80] sm:$0xff] %v447
  %622 = vst [vmem:[#allocation2 + $0x88] sm:$0xff] %v450
  %623 = vst [vmem:[#allocation2 + $0x90] sm:$0xff] %v455
  %624 = vst [vmem:[#allocation2 + $0x98] sm:$0xff] %v458
  %625 = vst [vmem:[#allocation2 + $0xa0] sm:$0xff] %v463
  %626 = vst [vmem:[#allocation2 + $0xa8] sm:$0xff] %v466
  %627 = vst [vmem:[#allocation2 + $0xb0] sm:$0xff] %v471
  %628 = vst [vmem:[#allocation2 + $0xb8] sm:$0xff] %v474
  %629 = vst [vmem:[#allocation2 + $0xc0] sm:$0xff] %v479
  %630 = vst [vmem:[#allocation2 + $0xc8] sm:$0xff] %v482
  %631 = vst [vmem:[#allocation2 + $0xd0] sm:$0xff] %v487
  %632 = vst [vmem:[#allocation2 + $0xd8] sm:$0xff] %v490
  %633 = vst [vmem:[#allocation2 + $0xe0] sm:$0xff] %v495
  %634 = vst [vmem:[#allocation2 + $0xe8] sm:$0xff] %v498
  %635 = vst [vmem:[#allocation2 + $0xf0] sm:$0xff] %v503
  %636 = vst [vmem:[#allocation2 + $0xf8] sm:$0xff] %v506
  %v637 = vld [vmem:[%s0] sm:$0xff]
  %v638 = vld [vmem:[%s0 + $0x8] sm:$0xff]
  %v639 = vld [vmem:[%s0 + $0x10] sm:$0xff]
  %v640 = vld [vmem:[%s0 + $0x18] sm:$0xff]
  %v641 = vld [vmem:[%s0 + $0x20] sm:$0xff]
  %v642 = vld [vmem:[%s0 + $0x28] sm:$0xff]
  %v643 = vld [vmem:[%s0 + $0x30] sm:$0xff]
  %v644 = vld [vmem:[%s0 + $0x38] sm:$0xff]
  %v645 = vld [vmem:[%s0 + $0x40] sm:$0xff]
  %v646 = vld [vmem:[%s0 + $0x48] sm:$0xff]
  %v647 = vld [vmem:[%s0 + $0x50] sm:$0xff]
  %v648 = vld [vmem:[%s0 + $0x58] sm:$0xff]
  %v649 = vld [vmem:[%s0 + $0x60] sm:$0xff]
  %v650 = vld [vmem:[%s0 + $0x68] sm:$0xff]
  %v651 = vld [vmem:[%s0 + $0x70] sm:$0xff]
  %v652 = vld [vmem:[%s0 + $0x78] sm:$0xff]
  %v653 = vld [vmem:[%s0 + $0x80] sm:$0xff]
  %v654 = vld [vmem:[%s0 + $0x88] sm:$0xff]
  %v655 = vld [vmem:[%s0 + $0x90] sm:$0xff]
  %v656 = vld [vmem:[%s0 + $0x98] sm:$0xff]
  %v657 = vld [vmem:[%s0 + $0xa0] sm:$0xff]
  %v658 = vld [vmem:[%s0 + $0xa8] sm:$0xff]
  %v659 = vld [vmem:[%s0 + $0xb0] sm:$0xff]
  %v660 = vld [vmem:[%s0 + $0xb8] sm:$0xff]
  %v661 = vld [vmem:[%s0 + $0xc0] sm:$0xff]
  %v662 = vld [vmem:[%s0 + $0xc8] sm:$0xff]
  %v663 = vld [vmem:[%s0 + $0xd0] sm:$0xff]
  %v664 = vld [vmem:[%s0 + $0xd8] sm:$0xff]
  %v665 = vld [vmem:[%s0 + $0xe0] sm:$0xff]
  %v666 = vld [vmem:[%s0 + $0xe8] sm:$0xff]
  %v667 = vld [vmem:[%s0 + $0xf0] sm:$0xff]
  %v668 = vld [vmem:[%s0 + $0xf8] sm:$0xff]
  %v669 = vld [vmem:[#allocation2] sm:$0xff]
  %v670 = vld [vmem:[#allocation2 + $0x8] sm:$0xff]
  %v671 = vld [vmem:[#allocation2 + $0x10] sm:$0xff]
  %v672 = vld [vmem:[#allocation2 + $0x18] sm:$0xff]
  %v673 = vld [vmem:[#allocation2 + $0x20] sm:$0xff]
  %v674 = vld [vmem:[#allocation2 + $0x28] sm:$0xff]
  %v675 = vld [vmem:[#allocation2 + $0x30] sm:$0xff]
  %v676 = vld [vmem:[#allocation2 + $0x38] sm:$0xff]
  %v677 = vld [vmem:[#allocation2 + $0x40] sm:$0xff]
  %v678 = vld [vmem:[#allocation2 + $0x48] sm:$0xff]
  %v679 = vld [vmem:[#allocation2 + $0x50] sm:$0xff]
  %v680 = vld [vmem:[#allocation2 + $0x58] sm:$0xff]
  %v681 = vld [vmem:[#allocation2 + $0x60] sm:$0xff]
  %v682 = vld [vmem:[#allocation2 + $0x68] sm:$0xff]
  %v683 = vld [vmem:[#allocation2 + $0x70] sm:$0xff]
  %v684 = vld [vmem:[#allocation2 + $0x78] sm:$0xff]
  %v685 = vld [vmem:[#allocation2 + $0x80] sm:$0xff]
  %v686 = vld [vmem:[#allocation2 + $0x88] sm:$0xff]
  %v687 = vld [vmem:[#allocation2 + $0x90] sm:$0xff]
  %v688 = vld [vmem:[#allocation2 + $0x98] sm:$0xff]
  %v689 = vld [vmem:[#allocation2 + $0xa0] sm:$0xff]
  %v690 = vld [vmem:[#allocation2 + $0xa8] sm:$0xff]
  %v691 = vld [vmem:[#allocation2 + $0xb0] sm:$0xff]
  %v692 = vld [vmem:[#allocation2 + $0xb8] sm:$0xff]
  %v693 = vld [vmem:[#allocation2 + $0xc0] sm:$0xff]
  %v694 = vld [vmem:[#allocation2 + $0xc8] sm:$0xff]
  %v695 = vld [vmem:[#allocation2 + $0xd0] sm:$0xff]
  %v696 = vld [vmem:[#allocation2 + $0xd8] sm:$0xff]
  %v697 = vld [vmem:[#allocation2 + $0xe0] sm:$0xff]
  %v698 = vld [vmem:[#allocation2 + $0xe8] sm:$0xff]
  %v699 = vld [vmem:[#allocation2 + $0xf0] sm:$0xff]
  %v700 = vld [vmem:[#allocation2 + $0xf8] sm:$0xff]
  %v701 = vpack.c.bf16 %v670, %v669
  %v702 = vpack.c.bf16 %v672, %v671
  %v703 = vpack.c.bf16 %v674, %v673
  %v704 = vpack.c.bf16 %v676, %v675
  %v705 = vpack.c.bf16 %v678, %v677
  %v706 = vpack.c.bf16 %v680, %v679
  %v707 = vpack.c.bf16 %v682, %v681
  %v708 = vpack.c.bf16 %v684, %v683
  %v709 = vpack.c.bf16 %v686, %v685
  %v710 = vpack.c.bf16 %v688, %v687
  %v711 = vpack.c.bf16 %v690, %v689
  %v712 = vpack.c.bf16 %v692, %v691
  %v713 = vpack.c.bf16 %v694, %v693
  %v714 = vpack.c.bf16 %v696, %v695
  %v715 = vpack.c.bf16 %v698, %v697
  %v716 = vpack.c.bf16 %v700, %v699
  %v749 = vunpack.c.l.b16 %v637
  %v750 = vunpack.c.h.b16 %v637
  %v751 = vunpack.c.l.b16 %v638
  %v752 = vunpack.c.h.b16 %v638
  %v753 = vunpack.c.l.b16 %v639
  %v754 = vunpack.c.h.b16 %v639
  %v755 = vunpack.c.l.b16 %v640
  %v756 = vunpack.c.h.b16 %v640
  %v757 = vunpack.c.l.b16 %v641
  %v758 = vunpack.c.h.b16 %v641
  %v759 = vunpack.c.l.b16 %v642
  %v760 = vunpack.c.h.b16 %v642
  %v761 = vunpack.c.l.b16 %v643
  %v762 = vunpack.c.h.b16 %v643
  %v763 = vunpack.c.l.b16 %v644
  %v764 = vunpack.c.h.b16 %v644
  %v765 = vunpack.c.l.b16 %v645
  %v766 = vunpack.c.h.b16 %v645
  %v767 = vunpack.c.l.b16 %v646
  %v768 = vunpack.c.h.b16 %v646
  %v769 = vunpack.c.l.b16 %v647
  %v770 = vunpack.c.h.b16 %v647
  %v771 = vunpack.c.l.b16 %v648
  %v772 = vunpack.c.h.b16 %v648
  %v773 = vunpack.c.l.b16 %v649
  %v774 = vunpack.c.h.b16 %v649
  %v775 = vunpack.c.l.b16 %v650
  %v776 = vunpack.c.h.b16 %v650
  %v777 = vunpack.c.l.b16 %v651
  %v778 = vunpack.c.h.b16 %v651
  %v779 = vunpack.c.l.b16 %v652
  %v780 = vunpack.c.h.b16 %v652
  %v781 = vunpack.c.l.b16 %v653
  %v782 = vunpack.c.h.b16 %v653
  %v783 = vunpack.c.l.b16 %v654
  %v784 = vunpack.c.h.b16 %v654
  %v785 = vunpack.c.l.b16 %v655
  %v786 = vunpack.c.h.b16 %v655
  %v787 = vunpack.c.l.b16 %v656
  %v788 = vunpack.c.h.b16 %v656
  %v789 = vunpack.c.l.b16 %v657
  %v790 = vunpack.c.h.b16 %v657
  %v791 = vunpack.c.l.b16 %v658
  %v792 = vunpack.c.h.b16 %v658
  %v793 = vunpack.c.l.b16 %v659
  %v794 = vunpack.c.h.b16 %v659
  %v795 = vunpack.c.l.b16 %v660
  %v796 = vunpack.c.h.b16 %v660
  %v797 = vunpack.c.l.b16 %v661
  %v798 = vunpack.c.h.b16 %v661
  %v799 = vunpack.c.l.b16 %v662
  %v800 = vunpack.c.h.b16 %v662
  %v801 = vunpack.c.l.b16 %v663
  %v802 = vunpack.c.h.b16 %v663
  %v803 = vunpack.c.l.b16 %v664
  %v804 = vunpack.c.h.b16 %v664
  %v805 = vunpack.c.l.b16 %v665
  %v806 = vunpack.c.h.b16 %v665
  %v807 = vunpack.c.l.b16 %v666
  %v808 = vunpack.c.h.b16 %v666
  %v809 = vunpack.c.l.b16 %v667
  %v810 = vunpack.c.h.b16 %v667
  %v811 = vunpack.c.l.b16 %v668
  %v812 = vunpack.c.h.b16 %v668
  %v813 = vpack.c.b16 %v751, %v749
  %v814 = vpack.c.b16 %v752, %v750
  %v815 = vpack.c.b16 %v755, %v753
  %v816 = vpack.c.b16 %v756, %v754
  %v817 = vpack.c.b16 %v759, %v757
  %v818 = vpack.c.b16 %v760, %v758
  %v819 = vpack.c.b16 %v763, %v761
  %v820 = vpack.c.b16 %v764, %v762
  %v821 = vpack.c.b16 %v767, %v765
  %v822 = vpack.c.b16 %v768, %v766
  %v823 = vpack.c.b16 %v771, %v769
  %v824 = vpack.c.b16 %v772, %v770
  %v825 = vpack.c.b16 %v775, %v773
  %v826 = vpack.c.b16 %v776, %v774
  %v827 = vpack.c.b16 %v779, %v777
  %v828 = vpack.c.b16 %v780, %v778
  %v829 = vpack.c.b16 %v783, %v781
  %v830 = vpack.c.b16 %v784, %v782
  %v831 = vpack.c.b16 %v787, %v785
  %v832 = vpack.c.b16 %v788, %v786
  %v833 = vpack.c.b16 %v791, %v789
  %v834 = vpack.c.b16 %v792, %v790
  %v835 = vpack.c.b16 %v795, %v793
  %v836 = vpack.c.b16 %v796, %v794
  %v837 = vpack.c.b16 %v799, %v797
  %v838 = vpack.c.b16 %v800, %v798
  %v839 = vpack.c.b16 %v803, %v801
  %v840 = vpack.c.b16 %v804, %v802
  %v841 = vpack.c.b16 %v807, %v805
  %v842 = vpack.c.b16 %v808, %v806
  %v843 = vpack.c.b16 %v811, %v809
  %v844 = vpack.c.b16 %v812, %v810
  %877 = vmatprep.subr.bf16.mxu0 0
  %878 = vmatpush1.bf16.msra.mxu0 %v708
  %879 = vmatprep.subr.bf16.mxu0 0
  %880 = vmatpush1.bf16.msra.mxu0 %v707
  %881 = vmatprep.subr.bf16.mxu0 0
  %882 = vmatpush1.bf16.msra.mxu0 %v706
  %883 = vmatprep.subr.bf16.mxu0 0
  %884 = vmatpush1.bf16.msra.mxu0 %v705
  %885 = vmatprep.subr.bf16.mxu0 0
  %886 = vmatpush1.bf16.msra.mxu0 %v704
  %887 = vmatprep.subr.bf16.mxu0 0
  %888 = vmatpush1.bf16.msra.mxu0 %v703
  %889 = vmatprep.subr.bf16.mxu0 0
  %890 = vmatpush1.bf16.msra.mxu0 %v702
  %891 = vmatprep.subr.bf16.mxu0 0
  %892 = vmatpush1.bf16.msra.mxu0 %v701
  %893 = vmatprep.subr.bf16.mxu0 0
  %894 = vmatpush2.bf16.msra.mxu0 %v716
  %895 = vmatprep.subr.bf16.mxu0 0
  %896 = vmatpush2.bf16.msra.mxu0 %v715
  %897 = vmatprep.subr.bf16.mxu0 0
  %898 = vmatpush2.bf16.msra.mxu0 %v714
  %899 = vmatprep.subr.bf16.mxu0 0
  %900 = vmatpush2.bf16.msra.mxu0 %v713
  %901 = vmatprep.subr.bf16.mxu0 0
  %902 = vmatpush2.bf16.msra.mxu0 %v712
  %903 = vmatprep.subr.bf16.mxu0 0
  %904 = vmatpush2.bf16.msra.mxu0 %v711
  %905 = vmatprep.subr.bf16.mxu0 0
  %906 = vmatpush2.bf16.msra.mxu0 %v710
  %907 = vmatprep.subr.bf16.mxu0 0
  %908 = vmatpush2.bf16.msra.mxu0 %v709
  %909 = vmatprep.mubr.bf16.mxu0 %v814
  %910 = vmatmul.mubr.bf16.gmra.mxu0 %v813
  %v911 = vpop.f32.mrf.mxu0
  %v912 = vadd.f32 0.0, %v911
  %v913 = vpop.f32.mrf.mxu0
  %v914 = vpop.f32.mrf.mxu0
  %v915 = vadd.f32 0.0, %v914
  %v916 = vpop.f32.mrf.mxu0
  %917 = vmatprep.mubr.bf16.mxu0 %v816
  %918 = vmatmul.mubr.bf16.gmra.mxu0 %v815
  %v919 = vpop.f32.mrf.mxu0
  %v920 = vadd.f32 0.0, %v919
  %v921 = vpop.f32.mrf.mxu0
  %v922 = vpop.f32.mrf.mxu0
  %v923 = vadd.f32 0.0, %v922
  %v924 = vpop.f32.mrf.mxu0
  %925 = vmatprep.mubr.bf16.mxu0 %v818
  %926 = vmatmul.mubr.bf16.gmra.mxu0 %v817
  %v927 = vpop.f32.mrf.mxu0
  %v928 = vadd.f32 0.0, %v927
  %v929 = vpop.f32.mrf.mxu0
  %v930 = vpop.f32.mrf.mxu0
  %v931 = vadd.f32 0.0, %v930
  %v932 = vpop.f32.mrf.mxu0
  %933 = vmatprep.mubr.bf16.mxu0 %v820
  %934 = vmatmul.mubr.bf16.gmra.mxu0 %v819
  %v935 = vpop.f32.mrf.mxu0
  %v936 = vadd.f32 0.0, %v935
  %v937 = vpop.f32.mrf.mxu0
  %v938 = vpop.f32.mrf.mxu0
  %v939 = vadd.f32 0.0, %v938
  %v940 = vpop.f32.mrf.mxu0
  %941 = vmatprep.mubr.bf16.mxu0 %v822
  %942 = vmatmul.mubr.bf16.gmra.mxu0 %v821
  %v943 = vpop.f32.mrf.mxu0
  %v944 = vadd.f32 0.0, %v943
  %v945 = vpop.f32.mrf.mxu0
  %v946 = vpop.f32.mrf.mxu0
  %v947 = vadd.f32 0.0, %v946
  %v948 = vpop.f32.mrf.mxu0
  %949 = vmatprep.mubr.bf16.mxu0 %v824
  %950 = vmatmul.mubr.bf16.gmra.mxu0 %v823
  %v951 = vpop.f32.mrf.mxu0
  %v952 = vadd.f32 0.0, %v951
  %v953 = vpop.f32.mrf.mxu0
  %v954 = vpop.f32.mrf.mxu0
  %v955 = vadd.f32 0.0, %v954
  %v956 = vpop.f32.mrf.mxu0
  %957 = vmatprep.mubr.bf16.mxu0 %v826
  %958 = vmatmul.mubr.bf16.gmra.mxu0 %v825
  %v959 = vpop.f32.mrf.mxu0
  %v960 = vadd.f32 0.0, %v959
  %v961 = vpop.f32.mrf.mxu0
  %v962 = vpop.f32.mrf.mxu0
  %v963 = vadd.f32 0.0, %v962
  %v964 = vpop.f32.mrf.mxu0
  %965 = vmatprep.mubr.bf16.mxu0 %v828
  %966 = vmatmul.mubr.bf16.gmra.mxu0 %v827
  %v967 = vpop.f32.mrf.mxu0
  %v968 = vadd.f32 0.0, %v967
  %v969 = vpop.f32.mrf.mxu0
  %v970 = vpop.f32.mrf.mxu0
  %v971 = vadd.f32 0.0, %v970
  %v972 = vpop.f32.mrf.mxu0
  %973 = vmatprep.mubr.bf16.mxu0 %v830
  %974 = vmatmul.mubr.bf16.gmra.mxu0 %v829
  %v975 = vpop.f32.mrf.mxu0
  %v976 = vadd.f32 0.0, %v975
  %v977 = vpop.f32.mrf.mxu0
  %v978 = vpop.f32.mrf.mxu0
  %v979 = vadd.f32 0.0, %v978
  %v980 = vpop.f32.mrf.mxu0
  %981 = vmatprep.mubr.bf16.mxu0 %v832
  %982 = vmatmul.mubr.bf16.gmra.mxu0 %v831
  %v983 = vpop.f32.mrf.mxu0
  %v984 = vadd.f32 0.0, %v983
  %v985 = vpop.f32.mrf.mxu0
  %v986 = vpop.f32.mrf.mxu0
  %v987 = vadd.f32 0.0, %v986
  %v988 = vpop.f32.mrf.mxu0
  %989 = vmatprep.mubr.bf16.mxu0 %v834
  %990 = vmatmul.mubr.bf16.gmra.mxu0 %v833
  %v991 = vpop.f32.mrf.mxu0
  %v992 = vadd.f32 0.0, %v991
  %v993 = vpop.f32.mrf.mxu0
  %v994 = vpop.f32.mrf.mxu0
  %v995 = vadd.f32 0.0, %v994
  %v996 = vpop.f32.mrf.mxu0
  %997 = vmatprep.mubr.bf16.mxu0 %v836
  %998 = vmatmul.mubr.bf16.gmra.mxu0 %v835
  %v999 = vpop.f32.mrf.mxu0
  %v1000 = vadd.f32 0.0, %v999
  %v1001 = vpop.f32.mrf.mxu0
  %v1002 = vpop.f32.mrf.mxu0
  %v1003 = vadd.f32 0.0, %v1002
  %v1004 = vpop.f32.mrf.mxu0
  %1005 = vmatprep.mubr.bf16.mxu0 %v838
  %1006 = vmatmul.mubr.bf16.gmra.mxu0 %v837
  %v1007 = vpop.f32.mrf.mxu0
  %v1008 = vadd.f32 0.0, %v1007
  %v1009 = vpop.f32.mrf.mxu0
  %v1010 = vpop.f32.mrf.mxu0
  %v1011 = vadd.f32 0.0, %v1010
  %v1012 = vpop.f32.mrf.mxu0
  %1013 = vmatprep.mubr.bf16.mxu0 %v840
  %1014 = vmatmul.mubr.bf16.gmra.mxu0 %v839
  %v1015 = vpop.f32.mrf.mxu0
  %v1016 = vadd.f32 0.0, %v1015
  %v1017 = vpop.f32.mrf.mxu0
  %v1018 = vpop.f32.mrf.mxu0
  %v1019 = vadd.f32 0.0, %v1018
  %v1020 = vpop.f32.mrf.mxu0
  %1021 = vmatprep.mubr.bf16.mxu0 %v842
  %1022 = vmatmul.mubr.bf16.gmra.mxu0 %v841
  %v1023 = vpop.f32.mrf.mxu0
  %v1024 = vadd.f32 0.0, %v1023
  %v1025 = vpop.f32.mrf.mxu0
  %v1026 = vpop.f32.mrf.mxu0
  %v1027 = vadd.f32 0.0, %v1026
  %v1028 = vpop.f32.mrf.mxu0
  %1029 = vmatprep.mubr.bf16.mxu0 %v844
  %1030 = vmatmul.mubr.bf16.gmra.mxu0 %v843
  %v1031 = vpop.f32.mrf.mxu0
  %v1032 = vadd.f32 0.0, %v1031
  %v1033 = vpop.f32.mrf.mxu0
  %v1034 = vpop.f32.mrf.mxu0
  %v1035 = vadd.f32 0.0, %v1034
  %v1036 = vpop.f32.mrf.mxu0
  %1037 = vdwg.mxu0
  %v1038 = vld [vmem:[%s2] sm:$0xff]
  %v1039 = vld [vmem:[%s2 + $0x8] sm:$0xff]
  %v1040 = vld [vmem:[%s2 + $0x10] sm:$0xff]
  %v1041 = vld [vmem:[%s2 + $0x18] sm:$0xff]
  %v1042 = vld [vmem:[%s2 + $0x20] sm:$0xff]
  %v1043 = vld [vmem:[%s2 + $0x28] sm:$0xff]
  %v1044 = vld [vmem:[%s2 + $0x30] sm:$0xff]
  %v1045 = vld [vmem:[%s2 + $0x38] sm:$0xff]
  %v1046 = vld [vmem:[%s2 + $0x40] sm:$0xff]
  %v1047 = vld [vmem:[%s2 + $0x48] sm:$0xff]
  %v1048 = vld [vmem:[%s2 + $0x50] sm:$0xff]
  %v1049 = vld [vmem:[%s2 + $0x58] sm:$0xff]
  %v1050 = vld [vmem:[%s2 + $0x60] sm:$0xff]
  %v1051 = vld [vmem:[%s2 + $0x68] sm:$0xff]
  %v1052 = vld [vmem:[%s2 + $0x70] sm:$0xff]
  %v1053 = vld [vmem:[%s2 + $0x78] sm:$0xff]
  %v1054 = vld [vmem:[%s2 + $0x80] sm:$0xff]
  %v1055 = vld [vmem:[%s2 + $0x88] sm:$0xff]
  %v1056 = vld [vmem:[%s2 + $0x90] sm:$0xff]
  %v1057 = vld [vmem:[%s2 + $0x98] sm:$0xff]
  %v1058 = vld [vmem:[%s2 + $0xa0] sm:$0xff]
  %v1059 = vld [vmem:[%s2 + $0xa8] sm:$0xff]
  %v1060 = vld [vmem:[%s2 + $0xb0] sm:$0xff]
  %v1061 = vld [vmem:[%s2 + $0xb8] sm:$0xff]
  %v1062 = vld [vmem:[%s2 + $0xc0] sm:$0xff]
  %v1063 = vld [vmem:[%s2 + $0xc8] sm:$0xff]
  %v1064 = vld [vmem:[%s2 + $0xd0] sm:$0xff]
  %v1065 = vld [vmem:[%s2 + $0xd8] sm:$0xff]
  %v1066 = vld [vmem:[%s2 + $0xe0] sm:$0xff]
  %v1067 = vld [vmem:[%s2 + $0xe8] sm:$0xff]
  %v1068 = vld [vmem:[%s2 + $0xf0] sm:$0xff]
  %v1069 = vld [vmem:[%s2 + $0xf8] sm:$0xff]
  %v1070 = vadd.f32 %v1038, %v912
  %v1071 = vadd.f32 %v1039, %v915
  %v1072 = vadd.f32 %v1040, %v920
  %v1073 = vadd.f32 %v1041, %v923
  %v1074 = vadd.f32 %v1042, %v928
  %v1075 = vadd.f32 %v1043, %v931
  %v1076 = vadd.f32 %v1044, %v936
  %v1077 = vadd.f32 %v1045, %v939
  %v1078 = vadd.f32 %v1046, %v944
  %v1079 = vadd.f32 %v1047, %v947
  %v1080 = vadd.f32 %v1048, %v952
  %v1081 = vadd.f32 %v1049, %v955
  %v1082 = vadd.f32 %v1050, %v960
  %v1083 = vadd.f32 %v1051, %v963
  %v1084 = vadd.f32 %v1052, %v968
  %v1085 = vadd.f32 %v1053, %v971
  %v1086 = vadd.f32 %v1054, %v976
  %v1087 = vadd.f32 %v1055, %v979
  %v1088 = vadd.f32 %v1056, %v984
  %v1089 = vadd.f32 %v1057, %v987
  %v1090 = vadd.f32 %v1058, %v992
  %v1091 = vadd.f32 %v1059, %v995
  %v1092 = vadd.f32 %v1060, %v1000
  %v1093 = vadd.f32 %v1061, %v1003
  %v1094 = vadd.f32 %v1062, %v1008
  %v1095 = vadd.f32 %v1063, %v1011
  %v1096 = vadd.f32 %v1064, %v1016
  %v1097 = vadd.f32 %v1065, %v1019
  %v1098 = vadd.f32 %v1066, %v1024
  %v1099 = vadd.f32 %v1067, %v1027
  %v1100 = vadd.f32 %v1068, %v1032
  %v1101 = vadd.f32 %v1069, %v1035
  %1102 = vst [vmem:[%s2] sm:$0xff] %v1070
  %1103 = vst [vmem:[%s2 + $0x8] sm:$0xff] %v1071
  %1104 = vst [vmem:[%s2 + $0x10] sm:$0xff] %v1072
  %1105 = vst [vmem:[%s2 + $0x18] sm:$0xff] %v1073
  %1106 = vst [vmem:[%s2 + $0x20] sm:$0xff] %v1074
  %1107 = vst [vmem:[%s2 + $0x28] sm:$0xff] %v1075
  %1108 = vst [vmem:[%s2 + $0x30] sm:$0xff] %v1076
  %1109 = vst [vmem:[%s2 + $0x38] sm:$0xff] %v1077
  %1110 = vst [vmem:[%s2 + $0x40] sm:$0xff] %v1078
  %1111 = vst [vmem:[%s2 + $0x48] sm:$0xff] %v1079
  %1112 = vst [vmem:[%s2 + $0x50] sm:$0xff] %v1080
  %1113 = vst [vmem:[%s2 + $0x58] sm:$0xff] %v1081
  %1114 = vst [vmem:[%s2 + $0x60] sm:$0xff] %v1082
  %1115 = vst [vmem:[%s2 + $0x68] sm:$0xff] %v1083
  %1116 = vst [vmem:[%s2 + $0x70] sm:$0xff] %v1084
  %1117 = vst [vmem:[%s2 + $0x78] sm:$0xff] %v1085
  %1118 = vst [vmem:[%s2 + $0x80] sm:$0xff] %v1086
  %1119 = vst [vmem:[%s2 + $0x88] sm:$0xff] %v1087
  %1120 = vst [vmem:[%s2 + $0x90] sm:$0xff] %v1088
  %1121 = vst [vmem:[%s2 + $0x98] sm:$0xff] %v1089
  %1122 = vst [vmem:[%s2 + $0xa0] sm:$0xff] %v1090
  %1123 = vst [vmem:[%s2 + $0xa8] sm:$0xff] %v1091
  %1124 = vst [vmem:[%s2 + $0xb0] sm:$0xff] %v1092
  %1125 = vst [vmem:[%s2 + $0xb8] sm:$0xff] %v1093
  %1126 = vst [vmem:[%s2 + $0xc0] sm:$0xff] %v1094
  %1127 = vst [vmem:[%s2 + $0xc8] sm:$0xff] %v1095
  %1128 = vst [vmem:[%s2 + $0xd0] sm:$0xff] %v1096
  %1129 = vst [vmem:[%s2 + $0xd8] sm:$0xff] %v1097
  %1130 = vst [vmem:[%s2 + $0xe0] sm:$0xff] %v1098
  %1131 = vst [vmem:[%s2 + $0xe8] sm:$0xff] %v1099
  %1132 = vst [vmem:[%s2 + $0xf0] sm:$0xff] %v1100
  %1133 = vst [vmem:[%s2 + $0xf8] sm:$0xff] %v1101
  %1134 = vst [vmem:[#allocation2] sm:$0xff] %v912
  %1135 = vst [vmem:[#allocation2 + $0x8] sm:$0xff] %v915
  %1136 = vst [vmem:[#allocation2 + $0x10] sm:$0xff] %v920
  %1137 = vst [vmem:[#allocation2 + $0x18] sm:$0xff] %v923
  %1138 = vst [vmem:[#allocation2 + $0x20] sm:$0xff] %v928
  %1139 = vst [vmem:[#allocation2 + $0x28] sm:$0xff] %v931
  %1140 = vst [vmem:[#allocation2 + $0x30] sm:$0xff] %v936
  %1141 = vst [vmem:[#allocation2 + $0x38] sm:$0xff] %v939
  %1142 = vst [vmem:[#allocation2 + $0x40] sm:$0xff] %v944
  %1143 = vst [vmem:[#allocation2 + $0x48] sm:$0xff] %v947
  %1144 = vst [vmem:[#allocation2 + $0x50] sm:$0xff] %v952
  %1145 = vst [vmem:[#allocation2 + $0x58] sm:$0xff] %v955
  %1146 = vst [vmem:[#allocation2 + $0x60] sm:$0xff] %v960
  %1147 = vst [vmem:[#allocation2 + $0x68] sm:$0xff] %v963
  %1148 = vst [vmem:[#allocation2 + $0x70] sm:$0xff] %v968
  %1149 = vst [vmem:[#allocation2 + $0x78] sm:$0xff] %v971
  %1150 = vst [vmem:[#allocation2 + $0x80] sm:$0xff] %v976
  %1151 = vst [vmem:[#allocation2 + $0x88] sm:$0xff] %v979
  %1152 = vst [vmem:[#allocation2 + $0x90] sm:$0xff] %v984
  %1153 = vst [vmem:[#allocation2 + $0x98] sm:$0xff] %v987
  %1154 = vst [vmem:[#allocation2 + $0xa0] sm:$0xff] %v992
  %1155 = vst [vmem:[#allocation2 + $0xa8] sm:$0xff] %v995
  %1156 = vst [vmem:[#allocation2 + $0xb0] sm:$0xff] %v1000
  %1157 = vst [vmem:[#allocation2 + $0xb8] sm:$0xff] %v1003
  %1158 = vst [vmem:[#allocation2 + $0xc0] sm:$0xff] %v1008
  %1159 = vst [vmem:[#allocation2 + $0xc8] sm:$0xff] %v1011
  %1160 = vst [vmem:[#allocation2 + $0xd0] sm:$0xff] %v1016
  %1161 = vst [vmem:[#allocation2 + $0xd8] sm:$0xff] %v1019
  %1162 = vst [vmem:[#allocation2 + $0xe0] sm:$0xff] %v1024
  %1163 = vst [vmem:[#allocation2 + $0xe8] sm:$0xff] %v1027
  %1164 = vst [vmem:[#allocation2 + $0xf0] sm:$0xff] %v1032
  %1165 = vst [vmem:[#allocation2 + $0xf8] sm:$0xff] %v1035
  %v1166 = vld [vmem:[%s0] sm:$0xff]
  %v1167 = vld [vmem:[%s0 + $0x8] sm:$0xff]
  %v1168 = vld [vmem:[%s0 + $0x10] sm:$0xff]
  %v1169 = vld [vmem:[%s0 + $0x18] sm:$0xff]
  %v1170 = vld [vmem:[%s0 + $0x20] sm:$0xff]
  %v1171 = vld [vmem:[%s0 + $0x28] sm:$0xff]
  %v1172 = vld [vmem:[%s0 + $0x30] sm:$0xff]
  %v1173 = vld [vmem:[%s0 + $0x38] sm:$0xff]
  %v1174 = vld [vmem:[%s0 + $0x40] sm:$0xff]
  %v1175 = vld [vmem:[%s0 + $0x48] sm:$0xff]
  %v1176 = vld [vmem:[%s0 + $0x50] sm:$0xff]
  %v1177 = vld [vmem:[%s0 + $0x58] sm:$0xff]
  %v1178 = vld [vmem:[%s0 + $0x60] sm:$0xff]
  %v1179 = vld [vmem:[%s0 + $0x68] sm:$0xff]
  %v1180 = vld [vmem:[%s0 + $0x70] sm:$0xff]
  %v1181 = vld [vmem:[%s0 + $0x78] sm:$0xff]
  %v1182 = vld [vmem:[%s0 + $0x80] sm:$0xff]
  %v1183 = vld [vmem:[%s0 + $0x88] sm:$0xff]
  %v1184 = vld [vmem:[%s0 + $0x90] sm:$0xff]
  %v1185 = vld [vmem:[%s0 + $0x98] sm:$0xff]
  %v1186 = vld [vmem:[%s0 + $0xa0] sm:$0xff]
  %v1187 = vld [vmem:[%s0 + $0xa8] sm:$0xff]
  %v1188 = vld [vmem:[%s0 + $0xb0] sm:$0xff]
  %v1189 = vld [vmem:[%s0 + $0xb8] sm:$0xff]
  %v1190 = vld [vmem:[%s0 + $0xc0] sm:$0xff]
  %v1191 = vld [vmem:[%s0 + $0xc8] sm:$0xff]
  %v1192 = vld [vmem:[%s0 + $0xd0] sm:$0xff]
  %v1193 = vld [vmem:[%s0 + $0xd8] sm:$0xff]
  %v1194 = vld [vmem:[%s0 + $0xe0] sm:$0xff]
  %v1195 = vld [vmem:[%s0 + $0xe8] sm:$0xff]
  %v1196 = vld [vmem:[%s0 + $0xf0] sm:$0xff]
  %v1197 = vld [vmem:[%s0 + $0xf8] sm:$0xff]
  %v1198 = vld [vmem:[#allocation2] sm:$0xff]
  %v1199 = vld [vmem:[#allocation2 + $0x8] sm:$0xff]
  %v1200 = vld [vmem:[#allocation2 + $0x10] sm:$0xff]
  %v1201 = vld [vmem:[#allocation2 + $0x18] sm:$0xff]
  %v1202 = vld [vmem:[#allocation2 + $0x20] sm:$0xff]
  %v1203 = vld [vmem:[#allocation2 + $0x28] sm:$0xff]
  %v1204 = vld [vmem:[#allocation2 + $0x30] sm:$0xff]
  %v1205 = vld [vmem:[#allocation2 + $0x38] sm:$0xff]
  %v1206 = vld [vmem:[#allocation2 + $0x40] sm:$0xff]
  %v1207 = vld [vmem:[#allocation2 + $0x48] sm:$0xff]
  %v1208 = vld [vmem:[#allocation2 + $0x50] sm:$0xff]
  %v1209 = vld [vmem:[#allocation2 + $0x58] sm:$0xff]
  %v1210 = vld [vmem:[#allocation2 + $0x60] sm:$0xff]
  %v1211 = vld [vmem:[#allocation2 + $0x68] sm:$0xff]
  %v1212 = vld [vmem:[#allocation2 + $0x70] sm:$0xff]
  %v1213 = vld [vmem:[#allocation2 + $0x78] sm:$0xff]
  %v1214 = vld [vmem:[#allocation2 + $0x80] sm:$0xff]
  %v1215 = vld [vmem:[#allocation2 + $0x88] sm:$0xff]
  %v1216 = vld [vmem:[#allocation2 + $0x90] sm:$0xff]
  %v1217 = vld [vmem:[#allocation2 + $0x98] sm:$0xff]
  %v1218 = vld [vmem:[#allocation2 + $0xa0] sm:$0xff]
  %v1219 = vld [vmem:[#allocation2 + $0xa8] sm:$0xff]
  %v1220 = vld [vmem:[#allocation2 + $0xb0] sm:$0xff]
  %v1221 = vld [vmem:[#allocation2 + $0xb8] sm:$0xff]
  %v1222 = vld [vmem:[#allocation2 + $0xc0] sm:$0xff]
  %v1223 = vld [vmem:[#allocation2 + $0xc8] sm:$0xff]
  %v1224 = vld [vmem:[#allocation2 + $0xd0] sm:$0xff]
  %v1225 = vld [vmem:[#allocation2 + $0xd8] sm:$0xff]
  %v1226 = vld [vmem:[#allocation2 + $0xe0] sm:$0xff]
  %v1227 = vld [vmem:[#allocation2 + $0xe8] sm:$0xff]
  %v1228 = vld [vmem:[#allocation2 + $0xf0] sm:$0xff]
  %v1229 = vld [vmem:[#allocation2 + $0xf8] sm:$0xff]
  %v1230 = vpack.c.bf16 %v1199, %v1198
  %v1231 = vpack.c.bf16 %v1201, %v1200
  %v1232 = vpack.c.bf16 %v1203, %v1202
  %v1233 = vpack.c.bf16 %v1205, %v1204
  %v1234 = vpack.c.bf16 %v1207, %v1206
  %v1235 = vpack.c.bf16 %v1209, %v1208
  %v1236 = vpack.c.bf16 %v1211, %v1210
  %v1237 = vpack.c.bf16 %v1213, %v1212
  %v1238 = vpack.c.bf16 %v1215, %v1214
  %v1239 = vpack.c.bf16 %v1217, %v1216
  %v1240 = vpack.c.bf16 %v1219, %v1218
  %v1241 = vpack.c.bf16 %v1221, %v1220
  %v1242 = vpack.c.bf16 %v1223, %v1222
  %v1243 = vpack.c.bf16 %v1225, %v1224
  %v1244 = vpack.c.bf16 %v1227, %v1226
  %v1245 = vpack.c.bf16 %v1229, %v1228
  %v1278 = vunpack.c.l.b16 %v1166
  %v1279 = vunpack.c.h.b16 %v1166
  %v1280 = vunpack.c.l.b16 %v1167
  %v1281 = vunpack.c.h.b16 %v1167
  %v1282 = vunpack.c.l.b16 %v1168
  %v1283 = vunpack.c.h.b16 %v1168
  %v1284 = vunpack.c.l.b16 %v1169
  %v1285 = vunpack.c.h.b16 %v1169
  %v1286 = vunpack.c.l.b16 %v1170
  %v1287 = vunpack.c.h.b16 %v1170
  %v1288 = vunpack.c.l.b16 %v1171
  %v1289 = vunpack.c.h.b16 %v1171
  %v1290 = vunpack.c.l.b16 %v1172
  %v1291 = vunpack.c.h.b16 %v1172
  %v1292 = vunpack.c.l.b16 %v1173
  %v1293 = vunpack.c.h.b16 %v1173
  %v1294 = vunpack.c.l.b16 %v1174
  %v1295 = vunpack.c.h.b16 %v1174
  %v1296 = vunpack.c.l.b16 %v1175
  %v1297 = vunpack.c.h.b16 %v1175
  %v1298 = vunpack.c.l.b16 %v1176
  %v1299 = vunpack.c.h.b16 %v1176
  %v1300 = vunpack.c.l.b16 %v1177
  %v1301 = vunpack.c.h.b16 %v1177
  %v1302 = vunpack.c.l.b16 %v1178
  %v1303 = vunpack.c.h.b16 %v1178
  %v1304 = vunpack.c.l.b16 %v1179
  %v1305 = vunpack.c.h.b16 %v1179
  %v1306 = vunpack.c.l.b16 %v1180
  %v1307 = vunpack.c.h.b16 %v1180
  %v1308 = vunpack.c.l.b16 %v1181
  %v1309 = vunpack.c.h.b16 %v1181
  %v1310 = vunpack.c.l.b16 %v1182
  %v1311 = vunpack.c.h.b16 %v1182
  %v1312 = vunpack.c.l.b16 %v1183
  %v1313 = vunpack.c.h.b16 %v1183
  %v1314 = vunpack.c.l.b16 %v1184
  %v1315 = vunpack.c.h.b16 %v1184
  %v1316 = vunpack.c.l.b16 %v1185
  %v1317 = vunpack.c.h.b16 %v1185
  %v1318 = vunpack.c.l.b16 %v1186
  %v1319 = vunpack.c.h.b16 %v1186
  %v1320 = vunpack.c.l.b16 %v1187
  %v1321 = vunpack.c.h.b16 %v1187
  %v1322 = vunpack.c.l.b16 %v1188
  %v1323 = vunpack.c.h.b16 %v1188
  %v1324 = vunpack.c.l.b16 %v1189
  %v1325 = vunpack.c.h.b16 %v1189
  %v1326 = vunpack.c.l.b16 %v1190
  %v1327 = vunpack.c.h.b16 %v1190
  %v1328 = vunpack.c.l.b16 %v1191
  %v1329 = vunpack.c.h.b16 %v1191
  %v1330 = vunpack.c.l.b16 %v1192
  %v1331 = vunpack.c.h.b16 %v1192
  %v1332 = vunpack.c.l.b16 %v1193
  %v1333 = vunpack.c.h.b16 %v1193
  %v1334 = vunpack.c.l.b16 %v1194
  %v1335 = vunpack.c.h.b16 %v1194
  %v1336 = vunpack.c.l.b16 %v1195
  %v1337 = vunpack.c.h.b16 %v1195
  %v1338 = vunpack.c.l.b16 %v1196
  %v1339 = vunpack.c.h.b16 %v1196
  %v1340 = vunpack.c.l.b16 %v1197
  %v1341 = vunpack.c.h.b16 %v1197
  %v1342 = vpack.c.b16 %v1280, %v1278
  %v1343 = vpack.c.b16 %v1281, %v1279
  %v1344 = vpack.c.b16 %v1284, %v1282
  %v1345 = vpack.c.b16 %v1285, %v1283
  %v1346 = vpack.c.b16 %v1288, %v1286
  %v1347 = vpack.c.b16 %v1289, %v1287
  %v1348 = vpack.c.b16 %v1292, %v1290
  %v1349 = vpack.c.b16 %v1293, %v1291
  %v1350 = vpack.c.b16 %v1296, %v1294
  %v1351 = vpack.c.b16 %v1297, %v1295
  %v1352 = vpack.c.b16 %v1300, %v1298
  %v1353 = vpack.c.b16 %v1301, %v1299
  %v1354 = vpack.c.b16 %v1304, %v1302
  %v1355 = vpack.c.b16 %v1305, %v1303
  %v1356 = vpack.c.b16 %v1308, %v1306
  %v1357 = vpack.c.b16 %v1309, %v1307
  %v1358 = vpack.c.b16 %v1312, %v1310
  %v1359 = vpack.c.b16 %v1313, %v1311
  %v1360 = vpack.c.b16 %v1316, %v1314
  %v1361 = vpack.c.b16 %v1317, %v1315
  %v1362 = vpack.c.b16 %v1320, %v1318
  %v1363 = vpack.c.b16 %v1321, %v1319
  %v1364 = vpack.c.b16 %v1324, %v1322
  %v1365 = vpack.c.b16 %v1325, %v1323
  %v1366 = vpack.c.b16 %v1328, %v1326
  %v1367 = vpack.c.b16 %v1329, %v1327
  %v1368 = vpack.c.b16 %v1332, %v1330
  %v1369 = vpack.c.b16 %v1333, %v1331
  %v1370 = vpack.c.b16 %v1336, %v1334
  %v1371 = vpack.c.b16 %v1337, %v1335
  %v1372 = vpack.c.b16 %v1340, %v1338
  %v1373 = vpack.c.b16 %v1341, %v1339
  %1406 = vmatprep.subr.bf16.mxu0 0
  %1407 = vmatpush1.bf16.msra.mxu0 %v1237
  %1408 = vmatprep.subr.bf16.mxu0 0
  %1409 = vmatpush1.bf16.msra.mxu0 %v1236
  %1410 = vmatprep.subr.bf16.mxu0 0
  %1411 = vmatpush1.bf16.msra.mxu0 %v1235
  %1412 = vmatprep.subr.bf16.mxu0 0
  %1413 = vmatpush1.bf16.msra.mxu0 %v1234
  %1414 = vmatprep.subr.bf16.mxu0 0
  %1415 = vmatpush1.bf16.msra.mxu0 %v1233
  %1416 = vmatprep.subr.bf16.mxu0 0
  %1417 = vmatpush1.bf16.msra.mxu0 %v1232
  %1418 = vmatprep.subr.bf16.mxu0 0
  %1419 = vmatpush1.bf16.msra.mxu0 %v1231
  %1420 = vmatprep.subr.bf16.mxu0 0
  %1421 = vmatpush1.bf16.msra.mxu0 %v1230
  %1422 = vmatprep.subr.bf16.mxu0 0
  %1423 = vmatpush2.bf16.msra.mxu0 %v1245
  %1424 = vmatprep.subr.bf16.mxu0 0
  %1425 = vmatpush2.bf16.msra.mxu0 %v1244
  %1426 = vmatprep.subr.bf16.mxu0 0
  %1427 = vmatpush2.bf16.msra.mxu0 %v1243
  %1428 = vmatprep.subr.bf16.mxu0 0
  %1429 = vmatpush2.bf16.msra.mxu0 %v1242
  %1430 = vmatprep.subr.bf16.mxu0 0
  %1431 = vmatpush2.bf16.msra.mxu0 %v1241
  %1432 = vmatprep.subr.bf16.mxu0 0
  %1433 = vmatpush2.bf16.msra.mxu0 %v1240
  %1434 = vmatprep.subr.bf16.mxu0 0
  %1435 = vmatpush2.bf16.msra.mxu0 %v1239
  %1436 = vmatprep.subr.bf16.mxu0 0
  %1437 = vmatpush2.bf16.msra.mxu0 %v1238
  %1438 = vmatprep.mubr.bf16.mxu0 %v1343
  %1439 = vmatmul.mubr.bf16.gmra.mxu0 %v1342
  %v1440 = vpop.f32.mrf.mxu0
  %v1441 = vadd.f32 0.0, %v1440
  %v1442 = vpop.f32.mrf.mxu0
  %v1443 = vpop.f32.mrf.mxu0
  %v1444 = vadd.f32 0.0, %v1443
  %v1445 = vpop.f32.mrf.mxu0
  %1446 = vmatprep.mubr.bf16.mxu0 %v1345
  %1447 = vmatmul.mubr.bf16.gmra.mxu0 %v1344
  %v1448 = vpop.f32.mrf.mxu0
  %v1449 = vadd.f32 0.0, %v1448
  %v1450 = vpop.f32.mrf.mxu0
  %v1451 = vpop.f32.mrf.mxu0
  %v1452 = vadd.f32 0.0, %v1451
  %v1453 = vpop.f32.mrf.mxu0
  %1454 = vmatprep.mubr.bf16.mxu0 %v1347
  %1455 = vmatmul.mubr.bf16.gmra.mxu0 %v1346
  %v1456 = vpop.f32.mrf.mxu0
  %v1457 = vadd.f32 0.0, %v1456
  %v1458 = vpop.f32.mrf.mxu0
  %v1459 = vpop.f32.mrf.mxu0
  %v1460 = vadd.f32 0.0, %v1459
  %v1461 = vpop.f32.mrf.mxu0
  %1462 = vmatprep.mubr.bf16.mxu0 %v1349
  %1463 = vmatmul.mubr.bf16.gmra.mxu0 %v1348
  %v1464 = vpop.f32.mrf.mxu0
  %v1465 = vadd.f32 0.0, %v1464
  %v1466 = vpop.f32.mrf.mxu0
  %v1467 = vpop.f32.mrf.mxu0
  %v1468 = vadd.f32 0.0, %v1467
  %v1469 = vpop.f32.mrf.mxu0
  %1470 = vmatprep.mubr.bf16.mxu0 %v1351
  %1471 = vmatmul.mubr.bf16.gmra.mxu0 %v1350
  %v1472 = vpop.f32.mrf.mxu0
  %v1473 = vadd.f32 0.0, %v1472
  %v1474 = vpop.f32.mrf.mxu0
  %v1475 = vpop.f32.mrf.mxu0
  %v1476 = vadd.f32 0.0, %v1475
  %v1477 = vpop.f32.mrf.mxu0
  %1478 = vmatprep.mubr.bf16.mxu0 %v1353
  %1479 = vmatmul.mubr.bf16.gmra.mxu0 %v1352
  %v1480 = vpop.f32.mrf.mxu0
  %v1481 = vadd.f32 0.0, %v1480
  %v1482 = vpop.f32.mrf.mxu0
  %v1483 = vpop.f32.mrf.mxu0
  %v1484 = vadd.f32 0.0, %v1483
  %v1485 = vpop.f32.mrf.mxu0
  %1486 = vmatprep.mubr.bf16.mxu0 %v1355
  %1487 = vmatmul.mubr.bf16.gmra.mxu0 %v1354
  %v1488 = vpop.f32.mrf.mxu0
  %v1489 = vadd.f32 0.0, %v1488
  %v1490 = vpop.f32.mrf.mxu0
  %v1491 = vpop.f32.mrf.mxu0
  %v1492 = vadd.f32 0.0, %v1491
  %v1493 = vpop.f32.mrf.mxu0
  %1494 = vmatprep.mubr.bf16.mxu0 %v1357
  %1495 = vmatmul.mubr.bf16.gmra.mxu0 %v1356
  %v1496 = vpop.f32.mrf.mxu0
  %v1497 = vadd.f32 0.0, %v1496
  %v1498 = vpop.f32.mrf.mxu0
  %v1499 = vpop.f32.mrf.mxu0
  %v1500 = vadd.f32 0.0, %v1499
  %v1501 = vpop.f32.mrf.mxu0
  %1502 = vmatprep.mubr.bf16.mxu0 %v1359
  %1503 = vmatmul.mubr.bf16.gmra.mxu0 %v1358
  %v1504 = vpop.f32.mrf.mxu0
  %v1505 = vadd.f32 0.0, %v1504
  %v1506 = vpop.f32.mrf.mxu0
  %v1507 = vpop.f32.mrf.mxu0
  %v1508 = vadd.f32 0.0, %v1507
  %v1509 = vpop.f32.mrf.mxu0
  %1510 = vmatprep.mubr.bf16.mxu0 %v1361
  %1511 = vmatmul.mubr.bf16.gmra.mxu0 %v1360
  %v1512 = vpop.f32.mrf.mxu0
  %v1513 = vadd.f32 0.0, %v1512
  %v1514 = vpop.f32.mrf.mxu0
  %v1515 = vpop.f32.mrf.mxu0
  %v1516 = vadd.f32 0.0, %v1515
  %v1517 = vpop.f32.mrf.mxu0
  %1518 = vmatprep.mubr.bf16.mxu0 %v1363
  %1519 = vmatmul.mubr.bf16.gmra.mxu0 %v1362
  %v1520 = vpop.f32.mrf.mxu0
  %v1521 = vadd.f32 0.0, %v1520
  %v1522 = vpop.f32.mrf.mxu0
  %v1523 = vpop.f32.mrf.mxu0
  %v1524 = vadd.f32 0.0, %v1523
  %v1525 = vpop.f32.mrf.mxu0
  %1526 = vmatprep.mubr.bf16.mxu0 %v1365
  %1527 = vmatmul.mubr.bf16.gmra.mxu0 %v1364
  %v1528 = vpop.f32.mrf.mxu0
  %v1529 = vadd.f32 0.0, %v1528
  %v1530 = vpop.f32.mrf.mxu0
  %v1531 = vpop.f32.mrf.mxu0
  %v1532 = vadd.f32 0.0, %v1531
  %v1533 = vpop.f32.mrf.mxu0
  %1534 = vmatprep.mubr.bf16.mxu0 %v1367
  %1535 = vmatmul.mubr.bf16.gmra.mxu0 %v1366
  %v1536 = vpop.f32.mrf.mxu0
  %v1537 = vadd.f32 0.0, %v1536
  %v1538 = vpop.f32.mrf.mxu0
  %v1539 = vpop.f32.mrf.mxu0
  %v1540 = vadd.f32 0.0, %v1539
  %v1541 = vpop.f32.mrf.mxu0
  %1542 = vmatprep.mubr.bf16.mxu0 %v1369
  %1543 = vmatmul.mubr.bf16.gmra.mxu0 %v1368
  %v1544 = vpop.f32.mrf.mxu0
  %v1545 = vadd.f32 0.0, %v1544
  %v1546 = vpop.f32.mrf.mxu0
  %v1547 = vpop.f32.mrf.mxu0
  %v1548 = vadd.f32 0.0, %v1547
  %v1549 = vpop.f32.mrf.mxu0
  %1550 = vmatprep.mubr.bf16.mxu0 %v1371
  %1551 = vmatmul.mubr.bf16.gmra.mxu0 %v1370
  %v1552 = vpop.f32.mrf.mxu0
  %v1553 = vadd.f32 0.0, %v1552
  %v1554 = vpop.f32.mrf.mxu0
  %v1555 = vpop.f32.mrf.mxu0
  %v1556 = vadd.f32 0.0, %v1555
  %v1557 = vpop.f32.mrf.mxu0
  %1558 = vmatprep.mubr.bf16.mxu0 %v1373
  %1559 = vmatmul.mubr.bf16.gmra.mxu0 %v1372
  %v1560 = vpop.f32.mrf.mxu0
  %v1561 = vadd.f32 0.0, %v1560
  %v1562 = vpop.f32.mrf.mxu0
  %v1563 = vpop.f32.mrf.mxu0
  %v1564 = vadd.f32 0.0, %v1563
  %v1565 = vpop.f32.mrf.mxu0
  %1566 = vdwg.mxu0
  %v1567 = vld [vmem:[%s2] sm:$0xff]
  %v1568 = vld [vmem:[%s2 + $0x8] sm:$0xff]
  %v1569 = vld [vmem:[%s2 + $0x10] sm:$0xff]
  %v1570 = vld [vmem:[%s2 + $0x18] sm:$0xff]
  %v1571 = vld [vmem:[%s2 + $0x20] sm:$0xff]
  %v1572 = vld [vmem:[%s2 + $0x28] sm:$0xff]
  %v1573 = vld [vmem:[%s2 + $0x30] sm:$0xff]
  %v1574 = vld [vmem:[%s2 + $0x38] sm:$0xff]
  %v1575 = vld [vmem:[%s2 + $0x40] sm:$0xff]
  %v1576 = vld [vmem:[%s2 + $0x48] sm:$0xff]
  %v1577 = vld [vmem:[%s2 + $0x50] sm:$0xff]
  %v1578 = vld [vmem:[%s2 + $0x58] sm:$0xff]
  %v1579 = vld [vmem:[%s2 + $0x60] sm:$0xff]
  %v1580 = vld [vmem:[%s2 + $0x68] sm:$0xff]
  %v1581 = vld [vmem:[%s2 + $0x70] sm:$0xff]
  %v1582 = vld [vmem:[%s2 + $0x78] sm:$0xff]
  %v1583 = vld [vmem:[%s2 + $0x80] sm:$0xff]
  %v1584 = vld [vmem:[%s2 + $0x88] sm:$0xff]
  %v1585 = vld [vmem:[%s2 + $0x90] sm:$0xff]
  %v1586 = vld [vmem:[%s2 + $0x98] sm:$0xff]
  %v1587 = vld [vmem:[%s2 + $0xa0] sm:$0xff]
  %v1588 = vld [vmem:[%s2 + $0xa8] sm:$0xff]
  %v1589 = vld [vmem:[%s2 + $0xb0] sm:$0xff]
  %v1590 = vld [vmem:[%s2 + $0xb8] sm:$0xff]
  %v1591 = vld [vmem:[%s2 + $0xc0] sm:$0xff]
  %v1592 = vld [vmem:[%s2 + $0xc8] sm:$0xff]
  %v1593 = vld [vmem:[%s2 + $0xd0] sm:$0xff]
  %v1594 = vld [vmem:[%s2 + $0xd8] sm:$0xff]
  %v1595 = vld [vmem:[%s2 + $0xe0] sm:$0xff]
  %v1596 = vld [vmem:[%s2 + $0xe8] sm:$0xff]
  %v1597 = vld [vmem:[%s2 + $0xf0] sm:$0xff]
  %v1598 = vld [vmem:[%s2 + $0xf8] sm:$0xff]
  %v1599 = vadd.f32 %v1567, %v1441
  %v1600 = vadd.f32 %v1568, %v1444
  %v1601 = vadd.f32 %v1569, %v1449
  %v1602 = vadd.f32 %v1570, %v1452
  %v1603 = vadd.f32 %v1571, %v1457
  %v1604 = vadd.f32 %v1572, %v1460
  %v1605 = vadd.f32 %v1573, %v1465
  %v1606 = vadd.f32 %v1574, %v1468
  %v1607 = vadd.f32 %v1575, %v1473
  %v1608 = vadd.f32 %v1576, %v1476
  %v1609 = vadd.f32 %v1577, %v1481
  %v1610 = vadd.f32 %v1578, %v1484
  %v1611 = vadd.f32 %v1579, %v1489
  %v1612 = vadd.f32 %v1580, %v1492
  %v1613 = vadd.f32 %v1581, %v1497
  %v1614 = vadd.f32 %v1582, %v1500
  %v1615 = vadd.f32 %v1583, %v1505
  %v1616 = vadd.f32 %v1584, %v1508
  %v1617 = vadd.f32 %v1585, %v1513
  %v1618 = vadd.f32 %v1586, %v1516
  %v1619 = vadd.f32 %v1587, %v1521
  %v1620 = vadd.f32 %v1588, %v1524
  %v1621 = vadd.f32 %v1589, %v1529
  %v1622 = vadd.f32 %v1590, %v1532
  %v1623 = vadd.f32 %v1591, %v1537
  %v1624 = vadd.f32 %v1592, %v1540
  %v1625 = vadd.f32 %v1593, %v1545
  %v1626 = vadd.f32 %v1594, %v1548
  %v1627 = vadd.f32 %v1595, %v1553
  %v1628 = vadd.f32 %v1596, %v1556
  %v1629 = vadd.f32 %v1597, %v1561
  %v1630 = vadd.f32 %v1598, %v1564
  %1631 = vst [vmem:[%s2] sm:$0xff] %v1599
  %1632 = vst [vmem:[%s2 + $0x8] sm:$0xff] %v1600
  %1633 = vst [vmem:[%s2 + $0x10] sm:$0xff] %v1601
  %1634 = vst [vmem:[%s2 + $0x18] sm:$0xff] %v1602
  %1635 = vst [vmem:[%s2 + $0x20] sm:$0xff] %v1603
  %1636 = vst [vmem:[%s2 + $0x28] sm:$0xff] %v1604
  %1637 = vst [vmem:[%s2 + $0x30] sm:$0xff] %v1605
  %1638 = vst [vmem:[%s2 + $0x38] sm:$0xff] %v1606
  %1639 = vst [vmem:[%s2 + $0x40] sm:$0xff] %v1607
  %1640 = vst [vmem:[%s2 + $0x48] sm:$0xff] %v1608
  %1641 = vst [vmem:[%s2 + $0x50] sm:$0xff] %v1609
  %1642 = vst [vmem:[%s2 + $0x58] sm:$0xff] %v1610
  %1643 = vst [vmem:[%s2 + $0x60] sm:$0xff] %v1611
  %1644 = vst [vmem:[%s2 + $0x68] sm:$0xff] %v1612
  %1645 = vst [vmem:[%s2 + $0x70] sm:$0xff] %v1613
  %1646 = vst [vmem:[%s2 + $0x78] sm:$0xff] %v1614
  %1647 = vst [vmem:[%s2 + $0x80] sm:$0xff] %v1615
  %1648 = vst [vmem:[%s2 + $0x88] sm:$0xff] %v1616
  %1649 = vst [vmem:[%s2 + $0x90] sm:$0xff] %v1617
  %1650 = vst [vmem:[%s2 + $0x98] sm:$0xff] %v1618
  %1651 = vst [vmem:[%s2 + $0xa0] sm:$0xff] %v1619
  %1652 = vst [vmem:[%s2 + $0xa8] sm:$0xff] %v1620
  %1653 = vst [vmem:[%s2 + $0xb0] sm:$0xff] %v1621
  %1654 = vst [vmem:[%s2 + $0xb8] sm:$0xff] %v1622
  %1655 = vst [vmem:[%s2 + $0xc0] sm:$0xff] %v1623
  %1656 = vst [vmem:[%s2 + $0xc8] sm:$0xff] %v1624
  %1657 = vst [vmem:[%s2 + $0xd0] sm:$0xff] %v1625
  %1658 = vst [vmem:[%s2 + $0xd8] sm:$0xff] %v1626
  %1659 = vst [vmem:[%s2 + $0xe0] sm:$0xff] %v1627
  %1660 = vst [vmem:[%s2 + $0xe8] sm:$0xff] %v1628
  %1661 = vst [vmem:[%s2 + $0xf0] sm:$0xff] %v1629
  %1662 = vst [vmem:[%s2 + $0xf8] sm:$0xff] %v1630
  %1663 = vst [vmem:[#allocation2] sm:$0xff] %v1441
  %1664 = vst [vmem:[#allocation2 + $0x8] sm:$0xff] %v1444
  %1665 = vst [vmem:[#allocation2 + $0x10] sm:$0xff] %v1449
  %1666 = vst [vmem:[#allocation2 + $0x18] sm:$0xff] %v1452
  %1667 = vst [vmem:[#allocation2 + $0x20] sm:$0xff] %v1457
  %1668 = vst [vmem:[#allocation2 + $0x28] sm:$0xff] %v1460
  %1669 = vst [vmem:[#allocation2 + $0x30] sm:$0xff] %v1465
  %1670 = vst [vmem:[#allocation2 + $0x38] sm:$0xff] %v1468
  %1671 = vst [vmem:[#allocation2 + $0x40] sm:$0xff] %v1473
  %1672 = vst [vmem:[#allocation2 + $0x48] sm:$0xff] %v1476
  %1673 = vst [vmem:[#allocation2 + $0x50] sm:$0xff] %v1481
  %1674 = vst [vmem:[#allocation2 + $0x58] sm:$0xff] %v1484
  %1675 = vst [vmem:[#allocation2 + $0x60] sm:$0xff] %v1489
  %1676 = vst [vmem:[#allocation2 + $0x68] sm:$0xff] %v1492
  %1677 = vst [vmem:[#allocation2 + $0x70] sm:$0xff] %v1497
  %1678 = vst [vmem:[#allocation2 + $0x78] sm:$0xff] %v1500
  %1679 = vst [vmem:[#allocation2 + $0x80] sm:$0xff] %v1505
  %1680 = vst [vmem:[#allocation2 + $0x88] sm:$0xff] %v1508
  %1681 = vst [vmem:[#allocation2 + $0x90] sm:$0xff] %v1513
  %1682 = vst [vmem:[#allocation2 + $0x98] sm:$0xff] %v1516
  %1683 = vst [vmem:[#allocation2 + $0xa0] sm:$0xff] %v1521
  %1684 = vst [vmem:[#allocation2 + $0xa8] sm:$0xff] %v1524
  %1685 = vst [vmem:[#allocation2 + $0xb0] sm:$0xff] %v1529
  %1686 = vst [vmem:[#allocation2 + $0xb8] sm:$0xff] %v1532
  %1687 = vst [vmem:[#allocation2 + $0xc0] sm:$0xff] %v1537
  %1688 = vst [vmem:[#allocation2 + $0xc8] sm:$0xff] %v1540
  %1689 = vst [vmem:[#allocation2 + $0xd0] sm:$0xff] %v1545
  %1690 = vst [vmem:[#allocation2 + $0xd8] sm:$0xff] %v1548
  %1691 = vst [vmem:[#allocation2 + $0xe0] sm:$0xff] %v1553
  %1692 = vst [vmem:[#allocation2 + $0xe8] sm:$0xff] %v1556
  %1693 = vst [vmem:[#allocation2 + $0xf0] sm:$0xff] %v1561
  %1694 = vst [vmem:[#allocation2 + $0xf8] sm:$0xff] %v1564
  %v1695 = vld [vmem:[%s2] sm:$0xff]
  %v1696 = vld [vmem:[%s2 + $0x8] sm:$0xff]
  %v1697 = vld [vmem:[%s2 + $0x10] sm:$0xff]
  %v1698 = vld [vmem:[%s2 + $0x18] sm:$0xff]
  %v1699 = vld [vmem:[%s2 + $0x20] sm:$0xff]
  %v1700 = vld [vmem:[%s2 + $0x28] sm:$0xff]
  %v1701 = vld [vmem:[%s2 + $0x30] sm:$0xff]
  %v1702 = vld [vmem:[%s2 + $0x38] sm:$0xff]
  %v1703 = vld [vmem:[%s2 + $0x40] sm:$0xff]
  %v1704 = vld [vmem:[%s2 + $0x48] sm:$0xff]
  %v1705 = vld [vmem:[%s2 + $0x50] sm:$0xff]
  %v1706 = vld [vmem:[%s2 + $0x58] sm:$0xff]
  %v1707 = vld [vmem:[%s2 + $0x60] sm:$0xff]
  %v1708 = vld [vmem:[%s2 + $0x68] sm:$0xff]
  %v1709 = vld [vmem:[%s2 + $0x70] sm:$0xff]
  %v1710 = vld [vmem:[%s2 + $0x78] sm:$0xff]
  %v1711 = vld [vmem:[%s2 + $0x80] sm:$0xff]
  %v1712 = vld [vmem:[%s2 + $0x88] sm:$0xff]
  %v1713 = vld [vmem:[%s2 + $0x90] sm:$0xff]
  %v1714 = vld [vmem:[%s2 + $0x98] sm:$0xff]
  %v1715 = vld [vmem:[%s2 + $0xa0] sm:$0xff]
  %v1716 = vld [vmem:[%s2 + $0xa8] sm:$0xff]
  %v1717 = vld [vmem:[%s2 + $0xb0] sm:$0xff]
  %v1718 = vld [vmem:[%s2 + $0xb8] sm:$0xff]
  %v1719 = vld [vmem:[%s2 + $0xc0] sm:$0xff]
  %v1720 = vld [vmem:[%s2 + $0xc8] sm:$0xff]
  %v1721 = vld [vmem:[%s2 + $0xd0] sm:$0xff]
  %v1722 = vld [vmem:[%s2 + $0xd8] sm:$0xff]
  %v1723 = vld [vmem:[%s2 + $0xe0] sm:$0xff]
  %v1724 = vld [vmem:[%s2 + $0xe8] sm:$0xff]
  %v1725 = vld [vmem:[%s2 + $0xf0] sm:$0xff]
  %v1726 = vld [vmem:[%s2 + $0xf8] sm:$0xff]
  %v1727 = vmul.f32 %v1695, 0.25
  %v1728 = vmul.f32 %v1696, 0.25
  %v1729 = vmul.f32 %v1697, 0.25
  %v1730 = vmul.f32 %v1698, 0.25
  %v1731 = vmul.f32 %v1699, 0.25
  %v1732 = vmul.f32 %v1700, 0.25
  %v1733 = vmul.f32 %v1701, 0.25
  %v1734 = vmul.f32 %v1702, 0.25
  %v1735 = vmul.f32 %v1703, 0.25
  %v1736 = vmul.f32 %v1704, 0.25
  %v1737 = vmul.f32 %v1705, 0.25
  %v1738 = vmul.f32 %v1706, 0.25
  %v1739 = vmul.f32 %v1707, 0.25
  %v1740 = vmul.f32 %v1708, 0.25
  %v1741 = vmul.f32 %v1709, 0.25
  %v1742 = vmul.f32 %v1710, 0.25
  %v1743 = vmul.f32 %v1711, 0.25
  %v1744 = vmul.f32 %v1712, 0.25
  %v1745 = vmul.f32 %v1713, 0.25
  %v1746 = vmul.f32 %v1714, 0.25
  %v1747 = vmul.f32 %v1715, 0.25
  %v1748 = vmul.f32 %v1716, 0.25
  %v1749 = vmul.f32 %v1717, 0.25
  %v1750 = vmul.f32 %v1718, 0.25
  %v1751 = vmul.f32 %v1719, 0.25
  %v1752 = vmul.f32 %v1720, 0.25
  %v1753 = vmul.f32 %v1721, 0.25
  %v1754 = vmul.f32 %v1722, 0.25
  %v1755 = vmul.f32 %v1723, 0.25
  %v1756 = vmul.f32 %v1724, 0.25
  %v1757 = vmul.f32 %v1725, 0.25
  %v1758 = vmul.f32 %v1726, 0.25
  %1759 = vst [vmem:[%s2] sm:$0xff] %v1727
  %1760 = vst [vmem:[%s2 + $0x8] sm:$0xff] %v1728
  %1761 = vst [vmem:[%s2 + $0x10] sm:$0xff] %v1729
  %1762 = vst [vmem:[%s2 + $0x18] sm:$0xff] %v1730
  %1763 = vst [vmem:[%s2 + $0x20] sm:$0xff] %v1731
  %1764 = vst [vmem:[%s2 + $0x28] sm:$0xff] %v1732
  %1765 = vst [vmem:[%s2 + $0x30] sm:$0xff] %v1733
  %1766 = vst [vmem:[%s2 + $0x38] sm:$0xff] %v1734
  %1767 = vst [vmem:[%s2 + $0x40] sm:$0xff] %v1735
  %1768 = vst [vmem:[%s2 + $0x48] sm:$0xff] %v1736
  %1769 = vst [vmem:[%s2 + $0x50] sm:$0xff] %v1737
  %1770 = vst [vmem:[%s2 + $0x58] sm:$0xff] %v1738
  %1771 = vst [vmem:[%s2 + $0x60] sm:$0xff] %v1739
  %1772 = vst [vmem:[%s2 + $0x68] sm:$0xff] %v1740
  %1773 = vst [vmem:[%s2 + $0x70] sm:$0xff] %v1741
  %1774 = vst [vmem:[%s2 + $0x78] sm:$0xff] %v1742
  %1775 = vst [vmem:[%s2 + $0x80] sm:$0xff] %v1743
  %1776 = vst [vmem:[%s2 + $0x88] sm:$0xff] %v1744
  %1777 = vst [vmem:[%s2 + $0x90] sm:$0xff] %v1745
  %1778 = vst [vmem:[%s2 + $0x98] sm:$0xff] %v1746
  %1779 = vst [vmem:[%s2 + $0xa0] sm:$0xff] %v1747
  %1780 = vst [vmem:[%s2 + $0xa8] sm:$0xff] %v1748
  %1781 = vst [vmem:[%s2 + $0xb0] sm:$0xff] %v1749
  %1782 = vst [vmem:[%s2 + $0xb8] sm:$0xff] %v1750
  %1783 = vst [vmem:[%s2 + $0xc0] sm:$0xff] %v1751
  %1784 = vst [vmem:[%s2 + $0xc8] sm:$0xff] %v1752
  %1785 = vst [vmem:[%s2 + $0xd0] sm:$0xff] %v1753
  %1786 = vst [vmem:[%s2 + $0xd8] sm:$0xff] %v1754
  %1787 = vst [vmem:[%s2 + $0xe0] sm:$0xff] %v1755
  %1788 = vst [vmem:[%s2 + $0xe8] sm:$0xff] %v1756
  %1789 = vst [vmem:[%s2 + $0xf0] sm:$0xff] %v1757
  %1790 = vst [vmem:[%s2 + $0xf8] sm:$0xff] %v1758
  // Predicated region
  $region10: #{lightgcn_forward.1} parent=0 // pred_check
    _
  $region11: #{lightgcn_forward.1} parent=0 // pred_check_branch
    %1792 = sbr.rel (0) target = $region13
  $region12: #{lightgcn_forward.1} parent=0 // pred_region
    _
  $region13: #{lightgcn_forward.1} parent=0 // pred_fallthru
    _
  // Predicated region
  $region14: #{lightgcn_forward.1} parent=0 // pred_check
    _
  $region15: #{lightgcn_forward.1} parent=0 // pred_check_branch
    %1794 = sbr.rel (0) target = $region17
  $region16: #{lightgcn_forward.1} parent=0 // pred_region
    _
  $region17: #{lightgcn_forward.1} parent=0 // pred_fallthru
    _

</llo_original>
